<compile_context>
chip_gen: v7x
topology: tpu7x:2x2x1
jax: 0.10.0
libtpu: 0.0.40
codegen_flags: <defaults>
</compile_context>

<pallas_src>
import math
import functools

import jax
import jax.numpy as jnp
from jax import lax
from jax.experimental import pallas as pl
from jax.experimental.pallas import tpu as pltpu

WL = 0.1206                  # wavelength [m]
SOURCE_POS = (0.0, 0.0)      # gateway position (scalars -> no captured array consts)
BN_EPS = 1e-5
FS_CONST = 20.0 * math.log10(4.0 * math.pi / WL)   # folded free-space constant
LANE = 128


def _regressor_kernel(x_ref, w0_ref, b0_ref, wh_ref, bh_ref, g_ref, be_ref,
                      wlast_ref, blast_ref, o_ref, *, n_hidden, n_valid, block_n):
    # x_ref: (2, Nb) feature-major; row 0 = x coord, row 1 = y coord.
    # global2local (source_pos baked in as Python scalars)
    x0 = x_ref[0:1, :] - SOURCE_POS[0]                      # (1, Nb)
    x1 = x_ref[1:2, :] - SOURCE_POS[1]                      # (1, Nb)

    # xy2rt: only the range r is consumed downstream (theta unused, polar=False)
    r = jnp.sqrt(x0 * x0 + x1 * x1)                         # (1, Nb)
    # TODO(synk): polar=True branch (atan2 feature) not implemented (off by default).

    # layer_lst[0]: Linear(2, H) + ReLU, feature-major -> (H, Nb).  K=2, so use
    # broadcasted multiply-adds instead of a degenerate MXU pass.
    w0 = w0_ref[...]                                        # (H, 2) PyTorch (out, in)
    out = w0[:, 0:1] * x0 + w0[:, 1:2] * x1 + b0_ref[...]   # (H, Nb)
    out = jnp.maximum(out, 0.0)

    need_mask = (n_valid != block_n)
    if need_mask:
        lane_idx = lax.broadcasted_iota(jnp.int32, (1, block_n), 1)
        valid = lane_idx < n_valid                          # exclude padded lanes from BN stats
    inv_n = 1.0 / float(n_valid)

    # layer_lst[1 .. n_layers-2]: Linear(H,H) -> BatchNorm1d(batch stats) -> ReLU
    for i in range(n_hidden):
        out = jnp.dot(wh_ref[i], out,
                      preferred_element_type=jnp.float32) + bh_ref[i]   # (H, Nb)
        # fused BN: one data pass for sum / sum-of-squares, then one FMA per elem
        stat_src = jnp.where(valid, out, 0.0) if need_mask else out
        s = jnp.sum(stat_src, axis=1, keepdims=True)                    # (H, 1)
        ss = jnp.sum(stat_src * stat_src, axis=1, keepdims=True)        # (H, 1)
        mean = s * inv_n
        var = jnp.maximum(ss * inv_n - mean * mean, 0.0)                # biased var
        scale = g_ref[i] * lax.rsqrt(var + BN_EPS)                      # (H, 1)
        shift = be_ref[i] - mean * scale                                # (H, 1)
        out = jnp.maximum(out * scale + shift, 0.0)

    # layer_lst[-1]: Linear(H, 1) as (1,H) @ (H,Nb) -> lane-dense (1, Nb)
    out = jnp.dot(wlast_ref[...], out,
                  preferred_element_type=jnp.float32) + blast_ref[...]

    # free-space loss -20*log10(4*pi*r/wl), constant part folded (apply_ploss=True)
    fs_loss = -20.0 * jnp.log10(r) - FS_CONST               # (1, Nb)
    # TODO(synk): detection_estimation=True branch (sigmoid on column 1) not implemented.
    o_ref[...] = fs_loss + out


def single_gw_regressor(x, params):
    """Forward pass.  x: (N, 2) float32.  Returns (N, 1) float32 RSSI."""
    w0, b0, wh, bh, gamma, beta, wlast, blast = params
    n = x.shape[0]
    n_hidden = wh.shape[0]
    h = w0.shape[0]

    # feature-major input (2, N), padded to a lane multiple.  Pad with 1.0 so
    # r > 0 on the padded lanes (they are excluded from BN stats and sliced off).
    n_pad = max(LANE, ((n + LANE - 1) // LANE) * LANE)
    xt = jnp.transpose(x)                                   # (2, N)
    if n_pad != n:
        xt = jnp.pad(xt, ((0, 0), (0, n_pad - n)), constant_values=1.0)

    # BatchNorm batch statistics require the whole batch in one block.
    block_n = n_pad
    grid = (n_pad // block_n,)

    kernel = functools.partial(_regressor_kernel, n_hidden=n_hidden,
                               n_valid=n, block_n=block_n)

    out_pad = pl.pallas_call(
        kernel,
        out_shape=jax.ShapeDtypeStruct((1, n_pad), jnp.float32),
        grid_spec=pltpu.PrefetchScalarGridSpec(
            num_scalar_prefetch=0,
            grid=grid,
            in_specs=[
                pl.BlockSpec((2, block_n), lambda i: (0, i)),          # x (feature-major)
                pl.BlockSpec((h, 2), lambda i: (0, 0)),                # w0 (resident)
                pl.BlockSpec((h, 1), lambda i: (0, 0)),                # b0
                pl.BlockSpec((n_hidden, h, h), lambda i: (0, 0, 0)),   # hidden weights
                pl.BlockSpec((n_hidden, h, 1), lambda i: (0, 0, 0)),   # hidden biases
                pl.BlockSpec((n_hidden, h, 1), lambda i: (0, 0, 0)),   # BN gamma
                pl.BlockSpec((n_hidden, h, 1), lambda i: (0, 0, 0)),   # BN beta
                pl.BlockSpec((1, h), lambda i: (0, 0)),                # last weight
                pl.BlockSpec((1, 1), lambda i: (0, 0)),                # last bias
            ],
            out_specs=pl.BlockSpec((1, block_n), lambda i: (0, i)),    # lane-dense output
        ),
        compiler_params=pltpu.CompilerParams(
            dimension_semantics=("parallel",),
            vmem_limit_bytes=32 * 1024 * 1024,
        ),
    )(xt, w0, b0, wh, bh, gamma, beta, wlast, blast)

    return out_pad[0, :n].reshape(n, 1)


def init_params(key, h_dim=32, n_layers=10):
    """Deterministic synthetic parameters matching the module's shapes.

    Weights are in native PyTorch (out_features, in_features) order; biases,
    BN gamma/beta are stored as (H, 1) columns for the feature-major layout.
    Only the layers actually reached by forward() are materialized:
      layer_lst[0]            : Linear(2, H)
      layer_lst[1..n_layers-2]: Linear(H, H)   (n_layers - 2 of them)
      bn_lst[1..n_layers-2]   : BatchNorm1d(H) (gamma=1, beta=0)
      layer_lst[-1]           : Linear(H, 1)
    """
    n_hidden = n_layers - 2
    ks = jax.random.split(key, 6)

    def lin_init(k, fan_in, shape):
        bound = 1.0 / math.sqrt(fan_in)
        return jax.random.uniform(k, shape, jnp.float32, -bound, bound)

    w0 = lin_init(ks[0], 2, (h_dim, 2))                   # Linear(2,H).weight
    b0 = lin_init(ks[1], 2, (h_dim, 1))
    wh = lin_init(ks[2], h_dim, (n_hidden, h_dim, h_dim))  # Linear(H,H).weight
    bh = lin_init(ks[3], h_dim, (n_hidden, h_dim, 1))
    gamma = jnp.ones((n_hidden, h_dim, 1), jnp.float32)   # PyTorch BN defaults
    beta = jnp.zeros((n_hidden, h_dim, 1), jnp.float32)
    wlast = lin_init(ks[4], h_dim, (1, h_dim))            # Linear(H,1).weight
    blast = lin_init(ks[5], h_dim, (1, 1))
    return (w0, b0, wh, bh, gamma, beta, wlast, blast)


if __name__ == "__main__":
    key = jax.random.PRNGKey(0)
    pkey, xkey = jax.random.split(key)

    H_DIM = 32
    N_LAYERS = 10
    BATCH = 256   # lane multiple -> no padding; feeds full 256-wide MXU tiles

    params = init_params(pkey, h_dim=H_DIM, n_layers=N_LAYERS)
    # sampled Cartesian positions, kept away from the source so log10(r) is finite
    x = jax.random.uniform(xkey, (BATCH, 2), jnp.float32, minval=1.0, maxval=50.0)

    out = single_gw_regressor(x, params)
    out = jax.block_until_ready(out)
    assert out.shape == (BATCH, 1) and out.dtype == jnp.float32
    assert bool(jnp.all(jnp.isfinite(out)))
    print("KERNEL_OK")
</pallas_src>

<mosaic_0001>
module attributes {stable_mosaic.version = 11 : i64} {
  func.func @_regressor_kernel(%arg0: i32, %arg1: memref<2x256xf32, #tpu.memory_space<vmem>>, %arg2: memref<32x2xf32, #tpu.memory_space<vmem>>, %arg3: memref<32x1xf32, #tpu.memory_space<vmem>>, %arg4: memref<8x32x32xf32, #tpu.memory_space<vmem>>, %arg5: memref<8x32x1xf32, #tpu.memory_space<vmem>>, %arg6: memref<8x32x1xf32, #tpu.memory_space<vmem>>, %arg7: memref<8x32x1xf32, #tpu.memory_space<vmem>>, %arg8: memref<1x32xf32, #tpu.memory_space<vmem>>, %arg9: memref<1x1xf32, #tpu.memory_space<vmem>>, %arg10: memref<1x256xf32, #tpu.memory_space<vmem>>) attributes {dimension_semantics = [#tpu.dimension_semantics<parallel>], iteration_bounds = array<i64: 1>, scalar_prefetch = 0 : i64, scratch_operands = 0 : i64, tpu.core_type = #tpu.core_type<tc>, window_params = [{transform_indices = @transform_0, window_bounds = array<i64: 2, 256>}, {pipeline_mode = #tpu.pipeline_mode<synchronous>, transform_indices = @transform_1, window_bounds = array<i64: 32, 2>}, {pipeline_mode = #tpu.pipeline_mode<synchronous>, transform_indices = @transform_2, window_bounds = array<i64: 32, 1>}, {pipeline_mode = #tpu.pipeline_mode<synchronous>, transform_indices = @transform_3, window_bounds = array<i64: 8, 32, 32>}, {pipeline_mode = #tpu.pipeline_mode<synchronous>, transform_indices = @transform_4, window_bounds = array<i64: 8, 32, 1>}, {pipeline_mode = #tpu.pipeline_mode<synchronous>, transform_indices = @transform_5, window_bounds = array<i64: 8, 32, 1>}, {pipeline_mode = #tpu.pipeline_mode<synchronous>, transform_indices = @transform_6, window_bounds = array<i64: 8, 32, 1>}, {pipeline_mode = #tpu.pipeline_mode<synchronous>, transform_indices = @transform_7, window_bounds = array<i64: 1, 32>}, {pipeline_mode = #tpu.pipeline_mode<synchronous>, transform_indices = @transform_8, window_bounds = array<i64: 1, 1>}, {transform_indices = @transform_9, window_bounds = array<i64: 1, 256>}]} {
    %c0 = arith.constant 0 : index
    %c0_0 = arith.constant 0 : index
    %0 = vector.load %arg1[%c0, %c0_0] : memref<2x256xf32, #tpu.memory_space<vmem>>, vector<1x256xf32>
    %cst = arith.constant 0.000000e+00 : f32
    %1 = vector.broadcast %cst : f32 to vector<1x256xf32>
    %2 = arith.subf %0, %1 : vector<1x256xf32>
    %c1 = arith.constant 1 : index
    %c0_1 = arith.constant 0 : index
    %3 = vector.load %arg1[%c1, %c0_1] : memref<2x256xf32, #tpu.memory_space<vmem>>, vector<1x256xf32>
    %cst_2 = arith.constant 0.000000e+00 : f32
    %4 = vector.broadcast %cst_2 : f32 to vector<1x256xf32>
    %5 = arith.subf %3, %4 : vector<1x256xf32>
    %6 = arith.mulf %2, %2 : vector<1x256xf32>
    %7 = arith.mulf %5, %5 : vector<1x256xf32>
    %8 = arith.addf %6, %7 : vector<1x256xf32>
    %9 = math.sqrt %8 : vector<1x256xf32>
    %c0_3 = arith.constant 0 : index
    %c0_4 = arith.constant 0 : index
    %10 = vector.load %arg2[%c0_3, %c0_4] : memref<32x2xf32, #tpu.memory_space<vmem>>, vector<32x2xf32>
    %11 = vector.extract_strided_slice %10 {offsets = [0, 0], sizes = [32, 1], strides = [1, 1]} : vector<32x2xf32> to vector<32x1xf32>
    %12 = vector.broadcast %11 : vector<32x1xf32> to vector<32x256xf32>
    %13 = vector.broadcast %2 : vector<1x256xf32> to vector<32x256xf32>
    %14 = arith.mulf %12, %13 : vector<32x256xf32>
    %15 = vector.extract_strided_slice %10 {offsets = [0, 1], sizes = [32, 1], strides = [1, 1]} : vector<32x2xf32> to vector<32x1xf32>
    %16 = vector.broadcast %15 : vector<32x1xf32> to vector<32x256xf32>
    %17 = vector.broadcast %5 : vector<1x256xf32> to vector<32x256xf32>
    %18 = arith.mulf %16, %17 : vector<32x256xf32>
    %19 = arith.addf %14, %18 : vector<32x256xf32>
    %c0_5 = arith.constant 0 : index
    %c0_6 = arith.constant 0 : index
    %20 = vector.load %arg3[%c0_5, %c0_6] : memref<32x1xf32, #tpu.memory_space<vmem>>, vector<32x1xf32>
    %21 = vector.broadcast %20 : vector<32x1xf32> to vector<32x256xf32>
    %22 = arith.addf %19, %21 : vector<32x256xf32>
    %cst_7 = arith.constant 0.000000e+00 : f32
    %23 = vector.broadcast %cst_7 : f32 to vector<32x256xf32>
    %24 = arith.maximumf %22, %23 : vector<32x256xf32>
    %c0_8 = arith.constant 0 : index
    %c0_9 = arith.constant 0 : index
    %c0_10 = arith.constant 0 : index
    %25 = vector.load %arg4[%c0_8, %c0_9, %c0_10] : memref<8x32x32xf32, #tpu.memory_space<vmem>>, vector<1x32x32xf32>
    %26 = vector.shape_cast %25 : vector<1x32x32xf32> to vector<32x32xf32>
    %cst_11 = arith.constant dense<0.000000e+00> : vector<32x256xf32>
    %27 = tpu.matmul %26, %24, %cst_11 {dimension_numbers = #tpu.dot_dimension_numbers<[1], [0], [0], [1], [0, 0, 1, 1], [], []>} : vector<32x32xf32>, vector<32x256xf32>, vector<32x256xf32> -> vector<32x256xf32>
    %c0_12 = arith.constant 0 : index
    %c0_13 = arith.constant 0 : index
    %c0_14 = arith.constant 0 : index
    %28 = vector.load %arg5[%c0_12, %c0_13, %c0_14] : memref<8x32x1xf32, #tpu.memory_space<vmem>>, vector<1x32x1xf32>
    %29 = vector.shape_cast %28 : vector<1x32x1xf32> to vector<32x1xf32>
    %30 = vector.broadcast %29 : vector<32x1xf32> to vector<32x256xf32>
    %31 = arith.addf %27, %30 : vector<32x256xf32>
    %cst_15 = arith.constant dense<0.000000e+00> : vector<32xf32>
    %32 = vector.multi_reduction <add>, %31, %cst_15 [1] : vector<32x256xf32> to vector<32xf32>
    %33 = vector.shape_cast %32 : vector<32xf32> to vector<32x1xf32>
    %34 = arith.mulf %31, %31 : vector<32x256xf32>
    %cst_16 = arith.constant dense<0.000000e+00> : vector<32xf32>
    %35 = vector.multi_reduction <add>, %34, %cst_16 [1] : vector<32x256xf32> to vector<32xf32>
    %36 = vector.shape_cast %35 : vector<32xf32> to vector<32x1xf32>
    %cst_17 = arith.constant 3.906250e-03 : f32
    %37 = vector.broadcast %cst_17 : f32 to vector<32x1xf32>
    %38 = arith.mulf %33, %37 : vector<32x1xf32>
    %cst_18 = arith.constant 3.906250e-03 : f32
    %39 = vector.broadcast %cst_18 : f32 to vector<32x1xf32>
    %40 = arith.mulf %36, %39 : vector<32x1xf32>
    %41 = arith.mulf %38, %38 : vector<32x1xf32>
    %42 = arith.subf %40, %41 : vector<32x1xf32>
    %cst_19 = arith.constant 0.000000e+00 : f32
    %43 = vector.broadcast %cst_19 : f32 to vector<32x1xf32>
    %44 = arith.maximumf %42, %43 : vector<32x1xf32>
    %c0_20 = arith.constant 0 : index
    %c0_21 = arith.constant 0 : index
    %c0_22 = arith.constant 0 : index
    %45 = vector.load %arg6[%c0_20, %c0_21, %c0_22] : memref<8x32x1xf32, #tpu.memory_space<vmem>>, vector<1x32x1xf32>
    %46 = vector.shape_cast %45 : vector<1x32x1xf32> to vector<32x1xf32>
    %cst_23 = arith.constant 9.99999974E-6 : f32
    %47 = vector.broadcast %cst_23 : f32 to vector<32x1xf32>
    %48 = arith.addf %44, %47 : vector<32x1xf32>
    %49 = math.rsqrt %48 : vector<32x1xf32>
    %50 = arith.mulf %46, %49 : vector<32x1xf32>
    %c0_24 = arith.constant 0 : index
    %c0_25 = arith.constant 0 : index
    %c0_26 = arith.constant 0 : index
    %51 = vector.load %arg7[%c0_24, %c0_25, %c0_26] : memref<8x32x1xf32, #tpu.memory_space<vmem>>, vector<1x32x1xf32>
    %52 = vector.shape_cast %51 : vector<1x32x1xf32> to vector<32x1xf32>
    %53 = arith.mulf %38, %50 : vector<32x1xf32>
    %54 = arith.subf %52, %53 : vector<32x1xf32>
    %55 = vector.broadcast %50 : vector<32x1xf32> to vector<32x256xf32>
    %56 = arith.mulf %31, %55 : vector<32x256xf32>
    %57 = vector.broadcast %54 : vector<32x1xf32> to vector<32x256xf32>
    %58 = arith.addf %56, %57 : vector<32x256xf32>
    %cst_27 = arith.constant 0.000000e+00 : f32
    %59 = vector.broadcast %cst_27 : f32 to vector<32x256xf32>
    %60 = arith.maximumf %58, %59 : vector<32x256xf32>
    %c1_28 = arith.constant 1 : index
    %c0_29 = arith.constant 0 : index
    %c0_30 = arith.constant 0 : index
    %61 = vector.load %arg4[%c1_28, %c0_29, %c0_30] : memref<8x32x32xf32, #tpu.memory_space<vmem>>, vector<1x32x32xf32>
    %62 = vector.shape_cast %61 : vector<1x32x32xf32> to vector<32x32xf32>
    %cst_31 = arith.constant dense<0.000000e+00> : vector<32x256xf32>
    %63 = tpu.matmul %62, %60, %cst_31 {dimension_numbers = #tpu.dot_dimension_numbers<[1], [0], [0], [1], [0, 0, 1, 1], [], []>} : vector<32x32xf32>, vector<32x256xf32>, vector<32x256xf32> -> vector<32x256xf32>
    %c1_32 = arith.constant 1 : index
    %c0_33 = arith.constant 0 : index
    %c0_34 = arith.constant 0 : index
    %64 = vector.load %arg5[%c1_32, %c0_33, %c0_34] : memref<8x32x1xf32, #tpu.memory_space<vmem>>, vector<1x32x1xf32>
    %65 = vector.shape_cast %64 : vector<1x32x1xf32> to vector<32x1xf32>
    %66 = vector.broadcast %65 : vector<32x1xf32> to vector<32x256xf32>
    %67 = arith.addf %63, %66 : vector<32x256xf32>
    %cst_35 = arith.constant dense<0.000000e+00> : vector<32xf32>
    %68 = vector.multi_reduction <add>, %67, %cst_35 [1] : vector<32x256xf32> to vector<32xf32>
    %69 = vector.shape_cast %68 : vector<32xf32> to vector<32x1xf32>
    %70 = arith.mulf %67, %67 : vector<32x256xf32>
    %cst_36 = arith.constant dense<0.000000e+00> : vector<32xf32>
    %71 = vector.multi_reduction <add>, %70, %cst_36 [1] : vector<32x256xf32> to vector<32xf32>
    %72 = vector.shape_cast %71 : vector<32xf32> to vector<32x1xf32>
    %cst_37 = arith.constant 3.906250e-03 : f32
    %73 = vector.broadcast %cst_37 : f32 to vector<32x1xf32>
    %74 = arith.mulf %69, %73 : vector<32x1xf32>
    %cst_38 = arith.constant 3.906250e-03 : f32
    %75 = vector.broadcast %cst_38 : f32 to vector<32x1xf32>
    %76 = arith.mulf %72, %75 : vector<32x1xf32>
    %77 = arith.mulf %74, %74 : vector<32x1xf32>
    %78 = arith.subf %76, %77 : vector<32x1xf32>
    %cst_39 = arith.constant 0.000000e+00 : f32
    %79 = vector.broadcast %cst_39 : f32 to vector<32x1xf32>
    %80 = arith.maximumf %78, %79 : vector<32x1xf32>
    %c1_40 = arith.constant 1 : index
    %c0_41 = arith.constant 0 : index
    %c0_42 = arith.constant 0 : index
    %81 = vector.load %arg6[%c1_40, %c0_41, %c0_42] : memref<8x32x1xf32, #tpu.memory_space<vmem>>, vector<1x32x1xf32>
    %82 = vector.shape_cast %81 : vector<1x32x1xf32> to vector<32x1xf32>
    %cst_43 = arith.constant 9.99999974E-6 : f32
    %83 = vector.broadcast %cst_43 : f32 to vector<32x1xf32>
    %84 = arith.addf %80, %83 : vector<32x1xf32>
    %85 = math.rsqrt %84 : vector<32x1xf32>
    %86 = arith.mulf %82, %85 : vector<32x1xf32>
    %c1_44 = arith.constant 1 : index
    %c0_45 = arith.constant 0 : index
    %c0_46 = arith.constant 0 : index
    %87 = vector.load %arg7[%c1_44, %c0_45, %c0_46] : memref<8x32x1xf32, #tpu.memory_space<vmem>>, vector<1x32x1xf32>
    %88 = vector.shape_cast %87 : vector<1x32x1xf32> to vector<32x1xf32>
    %89 = arith.mulf %74, %86 : vector<32x1xf32>
    %90 = arith.subf %88, %89 : vector<32x1xf32>
    %91 = vector.broadcast %86 : vector<32x1xf32> to vector<32x256xf32>
    %92 = arith.mulf %67, %91 : vector<32x256xf32>
    %93 = vector.broadcast %90 : vector<32x1xf32> to vector<32x256xf32>
    %94 = arith.addf %92, %93 : vector<32x256xf32>
    %cst_47 = arith.constant 0.000000e+00 : f32
    %95 = vector.broadcast %cst_47 : f32 to vector<32x256xf32>
    %96 = arith.maximumf %94, %95 : vector<32x256xf32>
    %c2 = arith.constant 2 : index
    %c0_48 = arith.constant 0 : index
    %c0_49 = arith.constant 0 : index
    %97 = vector.load %arg4[%c2, %c0_48, %c0_49] : memref<8x32x32xf32, #tpu.memory_space<vmem>>, vector<1x32x32xf32>
    %98 = vector.shape_cast %97 : vector<1x32x32xf32> to vector<32x32xf32>
    %cst_50 = arith.constant dense<0.000000e+00> : vector<32x256xf32>
    %99 = tpu.matmul %98, %96, %cst_50 {dimension_numbers = #tpu.dot_dimension_numbers<[1], [0], [0], [1], [0, 0, 1, 1], [], []>} : vector<32x32xf32>, vector<32x256xf32>, vector<32x256xf32> -> vector<32x256xf32>
    %c2_51 = arith.constant 2 : index
    %c0_52 = arith.constant 0 : index
    %c0_53 = arith.constant 0 : index
    %100 = vector.load %arg5[%c2_51, %c0_52, %c0_53] : memref<8x32x1xf32, #tpu.memory_space<vmem>>, vector<1x32x1xf32>
    %101 = vector.shape_cast %100 : vector<1x32x1xf32> to vector<32x1xf32>
    %102 = vector.broadcast %101 : vector<32x1xf32> to vector<32x256xf32>
    %103 = arith.addf %99, %102 : vector<32x256xf32>
    %cst_54 = arith.constant dense<0.000000e+00> : vector<32xf32>
    %104 = vector.multi_reduction <add>, %103, %cst_54 [1] : vector<32x256xf32> to vector<32xf32>
    %105 = vector.shape_cast %104 : vector<32xf32> to vector<32x1xf32>
    %106 = arith.mulf %103, %103 : vector<32x256xf32>
    %cst_55 = arith.constant dense<0.000000e+00> : vector<32xf32>
    %107 = vector.multi_reduction <add>, %106, %cst_55 [1] : vector<32x256xf32> to vector<32xf32>
    %108 = vector.shape_cast %107 : vector<32xf32> to vector<32x1xf32>
    %cst_56 = arith.constant 3.906250e-03 : f32
    %109 = vector.broadcast %cst_56 : f32 to vector<32x1xf32>
    %110 = arith.mulf %105, %109 : vector<32x1xf32>
    %cst_57 = arith.constant 3.906250e-03 : f32
    %111 = vector.broadcast %cst_57 : f32 to vector<32x1xf32>
    %112 = arith.mulf %108, %111 : vector<32x1xf32>
    %113 = arith.mulf %110, %110 : vector<32x1xf32>
    %114 = arith.subf %112, %113 : vector<32x1xf32>
    %cst_58 = arith.constant 0.000000e+00 : f32
    %115 = vector.broadcast %cst_58 : f32 to vector<32x1xf32>
    %116 = arith.maximumf %114, %115 : vector<32x1xf32>
    %c2_59 = arith.constant 2 : index
    %c0_60 = arith.constant 0 : index
    %c0_61 = arith.constant 0 : index
    %117 = vector.load %arg6[%c2_59, %c0_60, %c0_61] : memref<8x32x1xf32, #tpu.memory_space<vmem>>, vector<1x32x1xf32>
    %118 = vector.shape_cast %117 : vector<1x32x1xf32> to vector<32x1xf32>
    %cst_62 = arith.constant 9.99999974E-6 : f32
    %119 = vector.broadcast %cst_62 : f32 to vector<32x1xf32>
    %120 = arith.addf %116, %119 : vector<32x1xf32>
    %121 = math.rsqrt %120 : vector<32x1xf32>
    %122 = arith.mulf %118, %121 : vector<32x1xf32>
    %c2_63 = arith.constant 2 : index
    %c0_64 = arith.constant 0 : index
    %c0_65 = arith.constant 0 : index
    %123 = vector.load %arg7[%c2_63, %c0_64, %c0_65] : memref<8x32x1xf32, #tpu.memory_space<vmem>>, vector<1x32x1xf32>
    %124 = vector.shape_cast %123 : vector<1x32x1xf32> to vector<32x1xf32>
    %125 = arith.mulf %110, %122 : vector<32x1xf32>
    %126 = arith.subf %124, %125 : vector<32x1xf32>
    %127 = vector.broadcast %122 : vector<32x1xf32> to vector<32x256xf32>
    %128 = arith.mulf %103, %127 : vector<32x256xf32>
    %129 = vector.broadcast %126 : vector<32x1xf32> to vector<32x256xf32>
    %130 = arith.addf %128, %129 : vector<32x256xf32>
    %cst_66 = arith.constant 0.000000e+00 : f32
    %131 = vector.broadcast %cst_66 : f32 to vector<32x256xf32>
    %132 = arith.maximumf %130, %131 : vector<32x256xf32>
    %c3 = arith.constant 3 : index
    %c0_67 = arith.constant 0 : index
    %c0_68 = arith.constant 0 : index
    %133 = vector.load %arg4[%c3, %c0_67, %c0_68] : memref<8x32x32xf32, #tpu.memory_space<vmem>>, vector<1x32x32xf32>
    %134 = vector.shape_cast %133 : vector<1x32x32xf32> to vector<32x32xf32>
    %cst_69 = arith.constant dense<0.000000e+00> : vector<32x256xf32>
    %135 = tpu.matmul %134, %132, %cst_69 {dimension_numbers = #tpu.dot_dimension_numbers<[1], [0], [0], [1], [0, 0, 1, 1], [], []>} : vector<32x32xf32>, vector<32x256xf32>, vector<32x256xf32> -> vector<32x256xf32>
    %c3_70 = arith.constant 3 : index
    %c0_71 = arith.constant 0 : index
    %c0_72 = arith.constant 0 : index
    %136 = vector.load %arg5[%c3_70, %c0_71, %c0_72] : memref<8x32x1xf32, #tpu.memory_space<vmem>>, vector<1x32x1xf32>
    %137 = vector.shape_cast %136 : vector<1x32x1xf32> to vector<32x1xf32>
    %138 = vector.broadcast %137 : vector<32x1xf32> to vector<32x256xf32>
    %139 = arith.addf %135, %138 : vector<32x256xf32>
    %cst_73 = arith.constant dense<0.000000e+00> : vector<32xf32>
    %140 = vector.multi_reduction <add>, %139, %cst_73 [1] : vector<32x256xf32> to vector<32xf32>
    %141 = vector.shape_cast %140 : vector<32xf32> to vector<32x1xf32>
    %142 = arith.mulf %139, %139 : vector<32x256xf32>
    %cst_74 = arith.constant dense<0.000000e+00> : vector<32xf32>
    %143 = vector.multi_reduction <add>, %142, %cst_74 [1] : vector<32x256xf32> to vector<32xf32>
    %144 = vector.shape_cast %143 : vector<32xf32> to vector<32x1xf32>
    %cst_75 = arith.constant 3.906250e-03 : f32
    %145 = vector.broadcast %cst_75 : f32 to vector<32x1xf32>
    %146 = arith.mulf %141, %145 : vector<32x1xf32>
    %cst_76 = arith.constant 3.906250e-03 : f32
    %147 = vector.broadcast %cst_76 : f32 to vector<32x1xf32>
    %148 = arith.mulf %144, %147 : vector<32x1xf32>
    %149 = arith.mulf %146, %146 : vector<32x1xf32>
    %150 = arith.subf %148, %149 : vector<32x1xf32>
    %cst_77 = arith.constant 0.000000e+00 : f32
    %151 = vector.broadcast %cst_77 : f32 to vector<32x1xf32>
    %152 = arith.maximumf %150, %151 : vector<32x1xf32>
    %c3_78 = arith.constant 3 : index
    %c0_79 = arith.constant 0 : index
    %c0_80 = arith.constant 0 : index
    %153 = vector.load %arg6[%c3_78, %c0_79, %c0_80] : memref<8x32x1xf32, #tpu.memory_space<vmem>>, vector<1x32x1xf32>
    %154 = vector.shape_cast %153 : vector<1x32x1xf32> to vector<32x1xf32>
    %cst_81 = arith.constant 9.99999974E-6 : f32
    %155 = vector.broadcast %cst_81 : f32 to vector<32x1xf32>
    %156 = arith.addf %152, %155 : vector<32x1xf32>
    %157 = math.rsqrt %156 : vector<32x1xf32>
    %158 = arith.mulf %154, %157 : vector<32x1xf32>
    %c3_82 = arith.constant 3 : index
    %c0_83 = arith.constant 0 : index
    %c0_84 = arith.constant 0 : index
    %159 = vector.load %arg7[%c3_82, %c0_83, %c0_84] : memref<8x32x1xf32, #tpu.memory_space<vmem>>, vector<1x32x1xf32>
    %160 = vector.shape_cast %159 : vector<1x32x1xf32> to vector<32x1xf32>
    %161 = arith.mulf %146, %158 : vector<32x1xf32>
    %162 = arith.subf %160, %161 : vector<32x1xf32>
    %163 = vector.broadcast %158 : vector<32x1xf32> to vector<32x256xf32>
    %164 = arith.mulf %139, %163 : vector<32x256xf32>
    %165 = vector.broadcast %162 : vector<32x1xf32> to vector<32x256xf32>
    %166 = arith.addf %164, %165 : vector<32x256xf32>
    %cst_85 = arith.constant 0.000000e+00 : f32
    %167 = vector.broadcast %cst_85 : f32 to vector<32x256xf32>
    %168 = arith.maximumf %166, %167 : vector<32x256xf32>
    %c4 = arith.constant 4 : index
    %c0_86 = arith.constant 0 : index
    %c0_87 = arith.constant 0 : index
    %169 = vector.load %arg4[%c4, %c0_86, %c0_87] : memref<8x32x32xf32, #tpu.memory_space<vmem>>, vector<1x32x32xf32>
    %170 = vector.shape_cast %169 : vector<1x32x32xf32> to vector<32x32xf32>
    %cst_88 = arith.constant dense<0.000000e+00> : vector<32x256xf32>
    %171 = tpu.matmul %170, %168, %cst_88 {dimension_numbers = #tpu.dot_dimension_numbers<[1], [0], [0], [1], [0, 0, 1, 1], [], []>} : vector<32x32xf32>, vector<32x256xf32>, vector<32x256xf32> -> vector<32x256xf32>
    %c4_89 = arith.constant 4 : index
    %c0_90 = arith.constant 0 : index
    %c0_91 = arith.constant 0 : index
    %172 = vector.load %arg5[%c4_89, %c0_90, %c0_91] : memref<8x32x1xf32, #tpu.memory_space<vmem>>, vector<1x32x1xf32>
    %173 = vector.shape_cast %172 : vector<1x32x1xf32> to vector<32x1xf32>
    %174 = vector.broadcast %173 : vector<32x1xf32> to vector<32x256xf32>
    %175 = arith.addf %171, %174 : vector<32x256xf32>
    %cst_92 = arith.constant dense<0.000000e+00> : vector<32xf32>
    %176 = vector.multi_reduction <add>, %175, %cst_92 [1] : vector<32x256xf32> to vector<32xf32>
    %177 = vector.shape_cast %176 : vector<32xf32> to vector<32x1xf32>
    %178 = arith.mulf %175, %175 : vector<32x256xf32>
    %cst_93 = arith.constant dense<0.000000e+00> : vector<32xf32>
    %179 = vector.multi_reduction <add>, %178, %cst_93 [1] : vector<32x256xf32> to vector<32xf32>
    %180 = vector.shape_cast %179 : vector<32xf32> to vector<32x1xf32>
    %cst_94 = arith.constant 3.906250e-03 : f32
    %181 = vector.broadcast %cst_94 : f32 to vector<32x1xf32>
    %182 = arith.mulf %177, %181 : vector<32x1xf32>
    %cst_95 = arith.constant 3.906250e-03 : f32
    %183 = vector.broadcast %cst_95 : f32 to vector<32x1xf32>
    %184 = arith.mulf %180, %183 : vector<32x1xf32>
    %185 = arith.mulf %182, %182 : vector<32x1xf32>
    %186 = arith.subf %184, %185 : vector<32x1xf32>
    %cst_96 = arith.constant 0.000000e+00 : f32
    %187 = vector.broadcast %cst_96 : f32 to vector<32x1xf32>
    %188 = arith.maximumf %186, %187 : vector<32x1xf32>
    %c4_97 = arith.constant 4 : index
    %c0_98 = arith.constant 0 : index
    %c0_99 = arith.constant 0 : index
    %189 = vector.load %arg6[%c4_97, %c0_98, %c0_99] : memref<8x32x1xf32, #tpu.memory_space<vmem>>, vector<1x32x1xf32>
    %190 = vector.shape_cast %189 : vector<1x32x1xf32> to vector<32x1xf32>
    %cst_100 = arith.constant 9.99999974E-6 : f32
    %191 = vector.broadcast %cst_100 : f32 to vector<32x1xf32>
    %192 = arith.addf %188, %191 : vector<32x1xf32>
    %193 = math.rsqrt %192 : vector<32x1xf32>
    %194 = arith.mulf %190, %193 : vector<32x1xf32>
    %c4_101 = arith.constant 4 : index
    %c0_102 = arith.constant 0 : index
    %c0_103 = arith.constant 0 : index
    %195 = vector.load %arg7[%c4_101, %c0_102, %c0_103] : memref<8x32x1xf32, #tpu.memory_space<vmem>>, vector<1x32x1xf32>
    %196 = vector.shape_cast %195 : vector<1x32x1xf32> to vector<32x1xf32>
    %197 = arith.mulf %182, %194 : vector<32x1xf32>
    %198 = arith.subf %196, %197 : vector<32x1xf32>
    %199 = vector.broadcast %194 : vector<32x1xf32> to vector<32x256xf32>
    %200 = arith.mulf %175, %199 : vector<32x256xf32>
    %201 = vector.broadcast %198 : vector<32x1xf32> to vector<32x256xf32>
    %202 = arith.addf %200, %201 : vector<32x256xf32>
    %cst_104 = arith.constant 0.000000e+00 : f32
    %203 = vector.broadcast %cst_104 : f32 to vector<32x256xf32>
    %204 = arith.maximumf %202, %203 : vector<32x256xf32>
    %c5 = arith.constant 5 : index
    %c0_105 = arith.constant 0 : index
    %c0_106 = arith.constant 0 : index
    %205 = vector.load %arg4[%c5, %c0_105, %c0_106] : memref<8x32x32xf32, #tpu.memory_space<vmem>>, vector<1x32x32xf32>
    %206 = vector.shape_cast %205 : vector<1x32x32xf32> to vector<32x32xf32>
    %cst_107 = arith.constant dense<0.000000e+00> : vector<32x256xf32>
    %207 = tpu.matmul %206, %204, %cst_107 {dimension_numbers = #tpu.dot_dimension_numbers<[1], [0], [0], [1], [0, 0, 1, 1], [], []>} : vector<32x32xf32>, vector<32x256xf32>, vector<32x256xf32> -> vector<32x256xf32>
    %c5_108 = arith.constant 5 : index
    %c0_109 = arith.constant 0 : index
    %c0_110 = arith.constant 0 : index
    %208 = vector.load %arg5[%c5_108, %c0_109, %c0_110] : memref<8x32x1xf32, #tpu.memory_space<vmem>>, vector<1x32x1xf32>
    %209 = vector.shape_cast %208 : vector<1x32x1xf32> to vector<32x1xf32>
    %210 = vector.broadcast %209 : vector<32x1xf32> to vector<32x256xf32>
    %211 = arith.addf %207, %210 : vector<32x256xf32>
    %cst_111 = arith.constant dense<0.000000e+00> : vector<32xf32>
    %212 = vector.multi_reduction <add>, %211, %cst_111 [1] : vector<32x256xf32> to vector<32xf32>
    %213 = vector.shape_cast %212 : vector<32xf32> to vector<32x1xf32>
    %214 = arith.mulf %211, %211 : vector<32x256xf32>
    %cst_112 = arith.constant dense<0.000000e+00> : vector<32xf32>
    %215 = vector.multi_reduction <add>, %214, %cst_112 [1] : vector<32x256xf32> to vector<32xf32>
    %216 = vector.shape_cast %215 : vector<32xf32> to vector<32x1xf32>
    %cst_113 = arith.constant 3.906250e-03 : f32
    %217 = vector.broadcast %cst_113 : f32 to vector<32x1xf32>
    %218 = arith.mulf %213, %217 : vector<32x1xf32>
    %cst_114 = arith.constant 3.906250e-03 : f32
    %219 = vector.broadcast %cst_114 : f32 to vector<32x1xf32>
    %220 = arith.mulf %216, %219 : vector<32x1xf32>
    %221 = arith.mulf %218, %218 : vector<32x1xf32>
    %222 = arith.subf %220, %221 : vector<32x1xf32>
    %cst_115 = arith.constant 0.000000e+00 : f32
    %223 = vector.broadcast %cst_115 : f32 to vector<32x1xf32>
    %224 = arith.maximumf %222, %223 : vector<32x1xf32>
    %c5_116 = arith.constant 5 : index
    %c0_117 = arith.constant 0 : index
    %c0_118 = arith.constant 0 : index
    %225 = vector.load %arg6[%c5_116, %c0_117, %c0_118] : memref<8x32x1xf32, #tpu.memory_space<vmem>>, vector<1x32x1xf32>
    %226 = vector.shape_cast %225 : vector<1x32x1xf32> to vector<32x1xf32>
    %cst_119 = arith.constant 9.99999974E-6 : f32
    %227 = vector.broadcast %cst_119 : f32 to vector<32x1xf32>
    %228 = arith.addf %224, %227 : vector<32x1xf32>
    %229 = math.rsqrt %228 : vector<32x1xf32>
    %230 = arith.mulf %226, %229 : vector<32x1xf32>
    %c5_120 = arith.constant 5 : index
    %c0_121 = arith.constant 0 : index
    %c0_122 = arith.constant 0 : index
    %231 = vector.load %arg7[%c5_120, %c0_121, %c0_122] : memref<8x32x1xf32, #tpu.memory_space<vmem>>, vector<1x32x1xf32>
    %232 = vector.shape_cast %231 : vector<1x32x1xf32> to vector<32x1xf32>
    %233 = arith.mulf %218, %230 : vector<32x1xf32>
    %234 = arith.subf %232, %233 : vector<32x1xf32>
    %235 = vector.broadcast %230 : vector<32x1xf32> to vector<32x256xf32>
    %236 = arith.mulf %211, %235 : vector<32x256xf32>
    %237 = vector.broadcast %234 : vector<32x1xf32> to vector<32x256xf32>
    %238 = arith.addf %236, %237 : vector<32x256xf32>
    %cst_123 = arith.constant 0.000000e+00 : f32
    %239 = vector.broadcast %cst_123 : f32 to vector<32x256xf32>
    %240 = arith.maximumf %238, %239 : vector<32x256xf32>
    %c6 = arith.constant 6 : index
    %c0_124 = arith.constant 0 : index
    %c0_125 = arith.constant 0 : index
    %241 = vector.load %arg4[%c6, %c0_124, %c0_125] : memref<8x32x32xf32, #tpu.memory_space<vmem>>, vector<1x32x32xf32>
    %242 = vector.shape_cast %241 : vector<1x32x32xf32> to vector<32x32xf32>
    %cst_126 = arith.constant dense<0.000000e+00> : vector<32x256xf32>
    %243 = tpu.matmul %242, %240, %cst_126 {dimension_numbers = #tpu.dot_dimension_numbers<[1], [0], [0], [1], [0, 0, 1, 1], [], []>} : vector<32x32xf32>, vector<32x256xf32>, vector<32x256xf32> -> vector<32x256xf32>
    %c6_127 = arith.constant 6 : index
    %c0_128 = arith.constant 0 : index
    %c0_129 = arith.constant 0 : index
    %244 = vector.load %arg5[%c6_127, %c0_128, %c0_129] : memref<8x32x1xf32, #tpu.memory_space<vmem>>, vector<1x32x1xf32>
    %245 = vector.shape_cast %244 : vector<1x32x1xf32> to vector<32x1xf32>
    %246 = vector.broadcast %245 : vector<32x1xf32> to vector<32x256xf32>
    %247 = arith.addf %243, %246 : vector<32x256xf32>
    %cst_130 = arith.constant dense<0.000000e+00> : vector<32xf32>
    %248 = vector.multi_reduction <add>, %247, %cst_130 [1] : vector<32x256xf32> to vector<32xf32>
    %249 = vector.shape_cast %248 : vector<32xf32> to vector<32x1xf32>
    %250 = arith.mulf %247, %247 : vector<32x256xf32>
    %cst_131 = arith.constant dense<0.000000e+00> : vector<32xf32>
    %251 = vector.multi_reduction <add>, %250, %cst_131 [1] : vector<32x256xf32> to vector<32xf32>
    %252 = vector.shape_cast %251 : vector<32xf32> to vector<32x1xf32>
    %cst_132 = arith.constant 3.906250e-03 : f32
    %253 = vector.broadcast %cst_132 : f32 to vector<32x1xf32>
    %254 = arith.mulf %249, %253 : vector<32x1xf32>
    %cst_133 = arith.constant 3.906250e-03 : f32
    %255 = vector.broadcast %cst_133 : f32 to vector<32x1xf32>
    %256 = arith.mulf %252, %255 : vector<32x1xf32>
    %257 = arith.mulf %254, %254 : vector<32x1xf32>
    %258 = arith.subf %256, %257 : vector<32x1xf32>
    %cst_134 = arith.constant 0.000000e+00 : f32
    %259 = vector.broadcast %cst_134 : f32 to vector<32x1xf32>
    %260 = arith.maximumf %258, %259 : vector<32x1xf32>
    %c6_135 = arith.constant 6 : index
    %c0_136 = arith.constant 0 : index
    %c0_137 = arith.constant 0 : index
    %261 = vector.load %arg6[%c6_135, %c0_136, %c0_137] : memref<8x32x1xf32, #tpu.memory_space<vmem>>, vector<1x32x1xf32>
    %262 = vector.shape_cast %261 : vector<1x32x1xf32> to vector<32x1xf32>
    %cst_138 = arith.constant 9.99999974E-6 : f32
    %263 = vector.broadcast %cst_138 : f32 to vector<32x1xf32>
    %264 = arith.addf %260, %263 : vector<32x1xf32>
    %265 = math.rsqrt %264 : vector<32x1xf32>
    %266 = arith.mulf %262, %265 : vector<32x1xf32>
    %c6_139 = arith.constant 6 : index
    %c0_140 = arith.constant 0 : index
    %c0_141 = arith.constant 0 : index
    %267 = vector.load %arg7[%c6_139, %c0_140, %c0_141] : memref<8x32x1xf32, #tpu.memory_space<vmem>>, vector<1x32x1xf32>
    %268 = vector.shape_cast %267 : vector<1x32x1xf32> to vector<32x1xf32>
    %269 = arith.mulf %254, %266 : vector<32x1xf32>
    %270 = arith.subf %268, %269 : vector<32x1xf32>
    %271 = vector.broadcast %266 : vector<32x1xf32> to vector<32x256xf32>
    %272 = arith.mulf %247, %271 : vector<32x256xf32>
    %273 = vector.broadcast %270 : vector<32x1xf32> to vector<32x256xf32>
    %274 = arith.addf %272, %273 : vector<32x256xf32>
    %cst_142 = arith.constant 0.000000e+00 : f32
    %275 = vector.broadcast %cst_142 : f32 to vector<32x256xf32>
    %276 = arith.maximumf %274, %275 : vector<32x256xf32>
    %c7 = arith.constant 7 : index
    %c0_143 = arith.constant 0 : index
    %c0_144 = arith.constant 0 : index
    %277 = vector.load %arg4[%c7, %c0_143, %c0_144] : memref<8x32x32xf32, #tpu.memory_space<vmem>>, vector<1x32x32xf32>
    %278 = vector.shape_cast %277 : vector<1x32x32xf32> to vector<32x32xf32>
    %cst_145 = arith.constant dense<0.000000e+00> : vector<32x256xf32>
    %279 = tpu.matmul %278, %276, %cst_145 {dimension_numbers = #tpu.dot_dimension_numbers<[1], [0], [0], [1], [0, 0, 1, 1], [], []>} : vector<32x32xf32>, vector<32x256xf32>, vector<32x256xf32> -> vector<32x256xf32>
    %c7_146 = arith.constant 7 : index
    %c0_147 = arith.constant 0 : index
    %c0_148 = arith.constant 0 : index
    %280 = vector.load %arg5[%c7_146, %c0_147, %c0_148] : memref<8x32x1xf32, #tpu.memory_space<vmem>>, vector<1x32x1xf32>
    %281 = vector.shape_cast %280 : vector<1x32x1xf32> to vector<32x1xf32>
    %282 = vector.broadcast %281 : vector<32x1xf32> to vector<32x256xf32>
    %283 = arith.addf %279, %282 : vector<32x256xf32>
    %cst_149 = arith.constant dense<0.000000e+00> : vector<32xf32>
    %284 = vector.multi_reduction <add>, %283, %cst_149 [1] : vector<32x256xf32> to vector<32xf32>
    %285 = vector.shape_cast %284 : vector<32xf32> to vector<32x1xf32>
    %286 = arith.mulf %283, %283 : vector<32x256xf32>
    %cst_150 = arith.constant dense<0.000000e+00> : vector<32xf32>
    %287 = vector.multi_reduction <add>, %286, %cst_150 [1] : vector<32x256xf32> to vector<32xf32>
    %288 = vector.shape_cast %287 : vector<32xf32> to vector<32x1xf32>
    %cst_151 = arith.constant 3.906250e-03 : f32
    %289 = vector.broadcast %cst_151 : f32 to vector<32x1xf32>
    %290 = arith.mulf %285, %289 : vector<32x1xf32>
    %cst_152 = arith.constant 3.906250e-03 : f32
    %291 = vector.broadcast %cst_152 : f32 to vector<32x1xf32>
    %292 = arith.mulf %288, %291 : vector<32x1xf32>
    %293 = arith.mulf %290, %290 : vector<32x1xf32>
    %294 = arith.subf %292, %293 : vector<32x1xf32>
    %cst_153 = arith.constant 0.000000e+00 : f32
    %295 = vector.broadcast %cst_153 : f32 to vector<32x1xf32>
    %296 = arith.maximumf %294, %295 : vector<32x1xf32>
    %c7_154 = arith.constant 7 : index
    %c0_155 = arith.constant 0 : index
    %c0_156 = arith.constant 0 : index
    %297 = vector.load %arg6[%c7_154, %c0_155, %c0_156] : memref<8x32x1xf32, #tpu.memory_space<vmem>>, vector<1x32x1xf32>
    %298 = vector.shape_cast %297 : vector<1x32x1xf32> to vector<32x1xf32>
    %cst_157 = arith.constant 9.99999974E-6 : f32
    %299 = vector.broadcast %cst_157 : f32 to vector<32x1xf32>
    %300 = arith.addf %296, %299 : vector<32x1xf32>
    %301 = math.rsqrt %300 : vector<32x1xf32>
    %302 = arith.mulf %298, %301 : vector<32x1xf32>
    %c7_158 = arith.constant 7 : index
    %c0_159 = arith.constant 0 : index
    %c0_160 = arith.constant 0 : index
    %303 = vector.load %arg7[%c7_158, %c0_159, %c0_160] : memref<8x32x1xf32, #tpu.memory_space<vmem>>, vector<1x32x1xf32>
    %304 = vector.shape_cast %303 : vector<1x32x1xf32> to vector<32x1xf32>
    %305 = arith.mulf %290, %302 : vector<32x1xf32>
    %306 = arith.subf %304, %305 : vector<32x1xf32>
    %307 = vector.broadcast %302 : vector<32x1xf32> to vector<32x256xf32>
    %308 = arith.mulf %283, %307 : vector<32x256xf32>
    %309 = vector.broadcast %306 : vector<32x1xf32> to vector<32x256xf32>
    %310 = arith.addf %308, %309 : vector<32x256xf32>
    %cst_161 = arith.constant 0.000000e+00 : f32
    %311 = vector.broadcast %cst_161 : f32 to vector<32x256xf32>
    %312 = arith.maximumf %310, %311 : vector<32x256xf32>
    %c0_162 = arith.constant 0 : index
    %c0_163 = arith.constant 0 : index
    %313 = vector.load %arg8[%c0_162, %c0_163] : memref<1x32xf32, #tpu.memory_space<vmem>>, vector<1x32xf32>
    %cst_164 = arith.constant dense<0.000000e+00> : vector<1x256xf32>
    %314 = tpu.matmul %313, %312, %cst_164 {dimension_numbers = #tpu.dot_dimension_numbers<[1], [0], [0], [1], [0, 0, 1, 1], [], []>} : vector<1x32xf32>, vector<32x256xf32>, vector<1x256xf32> -> vector<1x256xf32>
    %c0_165 = arith.constant 0 : index
    %c0_166 = arith.constant 0 : index
    %315 = vector.load %arg9[%c0_165, %c0_166] : memref<1x1xf32, #tpu.memory_space<vmem>>, vector<1x1xf32>
    %316 = vector.broadcast %315 : vector<1x1xf32> to vector<1x256xf32>
    %317 = arith.addf %314, %316 : vector<1x256xf32>
    %318 = math.log %9 : vector<1x256xf32>
    %cst_167 = arith.constant 0.434294492 : f32
    %319 = vector.broadcast %cst_167 : f32 to vector<1x256xf32>
    %320 = arith.mulf %318, %319 : vector<1x256xf32>
    %cst_168 = arith.constant -2.000000e+01 : f32
    %321 = vector.broadcast %cst_168 : f32 to vector<1x256xf32>
    %322 = arith.mulf %321, %320 : vector<1x256xf32>
    %cst_169 = arith.constant 40.3572502 : f32
    %323 = vector.broadcast %cst_169 : f32 to vector<1x256xf32>
    %324 = arith.subf %322, %323 : vector<1x256xf32>
    %325 = arith.addf %324, %317 : vector<1x256xf32>
    %c0_170 = arith.constant 0 : index
    %c0_171 = arith.constant 0 : index
    %326 = vector.load %arg10[%c0_170, %c0_171] : memref<1x256xf32, #tpu.memory_space<vmem>>, vector<1x256xf32>
    tpu.vector_store %arg10[%c0_170, %c0_171], %325 {strides = array<i32>} : memref<1x256xf32, #tpu.memory_space<vmem>>, vector<1x256xf32>,
    return
  }
  func.func @transform_0(%arg0: i32) -> (i32, i32) {
    %c0_i32 = arith.constant 0 : i32
    %c0_i32_0 = arith.constant 0 : i32
    return %c0_i32, %arg0 : i32, i32
  }
  func.func @transform_1(%arg0: i32) -> (i32, i32) {
    %c0_i32 = arith.constant 0 : i32
    %c0_i32_0 = arith.constant 0 : i32
    %c0_i32_1 = arith.constant 0 : i32
    return %c0_i32, %c0_i32_0 : i32, i32
  }
  func.func @transform_2(%arg0: i32) -> (i32, i32) {
    %c0_i32 = arith.constant 0 : i32
    %c0_i32_0 = arith.constant 0 : i32
    %c0_i32_1 = arith.constant 0 : i32
    return %c0_i32, %c0_i32_0 : i32, i32
  }
  func.func @transform_3(%arg0: i32) -> (i32, i32, i32) {
    %c0_i32 = arith.constant 0 : i32
    %c0_i32_0 = arith.constant 0 : i32
    %c0_i32_1 = arith.constant 0 : i32
    %c0_i32_2 = arith.constant 0 : i32
    return %c0_i32, %c0_i32_0, %c0_i32_1 : i32, i32, i32
  }
  func.func @transform_4(%arg0: i32) -> (i32, i32, i32) {
    %c0_i32 = arith.constant 0 : i32
    %c0_i32_0 = arith.constant 0 : i32
    %c0_i32_1 = arith.constant 0 : i32
    %c0_i32_2 = arith.constant 0 : i32
    return %c0_i32, %c0_i32_0, %c0_i32_1 : i32, i32, i32
  }
  func.func @transform_5(%arg0: i32) -> (i32, i32, i32) {
    %c0_i32 = arith.constant 0 : i32
    %c0_i32_0 = arith.constant 0 : i32
    %c0_i32_1 = arith.constant 0 : i32
    %c0_i32_2 = arith.constant 0 : i32
    return %c0_i32, %c0_i32_0, %c0_i32_1 : i32, i32, i32
  }
  func.func @transform_6(%arg0: i32) -> (i32, i32, i32) {
    %c0_i32 = arith.constant 0 : i32
    %c0_i32_0 = arith.constant 0 : i32
    %c0_i32_1 = arith.constant 0 : i32
    %c0_i32_2 = arith.constant 0 : i32
    return %c0_i32, %c0_i32_0, %c0_i32_1 : i32, i32, i32
  }
  func.func @transform_7(%arg0: i32) -> (i32, i32) {
    %c0_i32 = arith.constant 0 : i32
    %c0_i32_0 = arith.constant 0 : i32
    %c0_i32_1 = arith.constant 0 : i32
    return %c0_i32, %c0_i32_0 : i32, i32
  }
  func.func @transform_8(%arg0: i32) -> (i32, i32) {
    %c0_i32 = arith.constant 0 : i32
    %c0_i32_0 = arith.constant 0 : i32
    %c0_i32_1 = arith.constant 0 : i32
    return %c0_i32, %c0_i32_0 : i32, i32
  }
  func.func @transform_9(%arg0: i32) -> (i32, i32) {
    %c0_i32 = arith.constant 0 : i32
    %c0_i32_0 = arith.constant 0 : i32
    return %c0_i32, %arg0 : i32, i32
  }
}

</mosaic_0001>

<llo_original>
// kernel: tpu_custom_call.1
$region0: #{tpu_custom_call.1}
  #allocation0 [shape = 'u32[]', space=smem, size = 0x4, offset = 0x4, fixed_abs, tag = 'smem constant byte address 0x4 - core index']
  #allocation1 [shape = 'u32[144,128]{1,0:T(1,128)}', space=vmem, size = 0x12000, scoped, tag = 'internal scratch']
  #allocation2 [shape = 'f32[1,1]{1,0:T(1,128)S(1)}', space=vmem, size = 0x200, scoped, tag = 'scoped memory for tpu_custom_call.1']
  %s0 = inlined_call_operand.vmem [shape: f32[2,256], index: 0, kind: input, shape index: {}]
  %s1 = inlined_call_operand.vmem [shape: f32[32,2], index: 1, kind: input, shape index: {}]
  %s2 = inlined_call_operand.vmem [shape: f32[32,1], index: 2, kind: input, shape index: {}]
  %s3 = inlined_call_operand.vmem [shape: f32[8,32,32], index: 3, kind: input, shape index: {}]
  %s4 = inlined_call_operand.vmem [shape: f32[8,32,1], index: 4, kind: input, shape index: {}]
  %s5 = inlined_call_operand.vmem [shape: f32[8,32,1], index: 5, kind: input, shape index: {}]
  %s6 = inlined_call_operand.vmem [shape: f32[8,32,1], index: 6, kind: input, shape index: {}]
  %s7 = inlined_call_operand.vmem [shape: f32[1,32], index: 7, kind: input, shape index: {}]
  %s8 = inlined_call_operand.<no memory space> [shape: f32[1,1], index: 8, kind: input, shape index: {}]
  %s9 = inlined_call_operand.hbm [shape: f32[1,256], index: 9, kind: output, shape index: {}]
  %s10 = sld [smem:[#allocation0]]
  $region46: #{tpu_custom_call.1} parent=0
    _
  %s12 = ssub.s32 1, %s10
  %s13 = scalar_select 0, %s12, %s10
  %v14 = vstv %s8
  %15 = vst [vmem:[#allocation2] sm:$0x1] %v14
  $region1: #{tpu_custom_call.1} parent=0
    #allocation3 [shape = 'u8[1024]{0}', space=vmem, size = 0x400, scoped, tag = 'output window, operand 0, single buffered']
    #allocation4 [shape = 's32[1]{0}', space=sflag, size = 0x4, scoped, tag = 'scoped memory for tpu_custom_call.1']
    %16 = vsyncpa [#allocation4], 0
    // Predicated region
    $region2: #{tpu_custom_call.1} parent=1 // pred_check
      _
    $region3: #{tpu_custom_call.1} parent=1 // pred_check_branch
      %18 = sbr.rel (0) target = $region5
    $region4: #{tpu_custom_call.1} parent=1 // pred_region
      _
    $region5: #{tpu_custom_call.1} parent=1 // pred_fallthru
      _
    // Predicated region
    $region6: #{tpu_custom_call.1} parent=1 // pred_check
      _
    $region7: #{tpu_custom_call.1} parent=1 // pred_check_branch
      %20 = sbr.rel (0) target = $region9
    $region8: #{tpu_custom_call.1} parent=1 // pred_region
      _
    $region9: #{tpu_custom_call.1} parent=1 // pred_fallthru
      _
    // Predicated region
    $region10: #{tpu_custom_call.1} parent=1 // pred_check
      _
    $region11: #{tpu_custom_call.1} parent=1 // pred_check_branch
      %22 = sbr.rel (0) target = $region13
    $region12: #{tpu_custom_call.1} parent=1 // pred_region
      _
    $region13: #{tpu_custom_call.1} parent=1 // pred_fallthru
      _
    // Predicated region
    $region14: #{tpu_custom_call.1} parent=1 // pred_check
      _
    $region15: #{tpu_custom_call.1} parent=1 // pred_check_branch
      %24 = sbr.rel (0) target = $region17
    $region16: #{tpu_custom_call.1} parent=1 // pred_region
      _
    $region17: #{tpu_custom_call.1} parent=1 // pred_fallthru
      _
    // Predicated region
    $region18: #{tpu_custom_call.1} parent=1 // pred_check
      _
    $region19: #{tpu_custom_call.1} parent=1 // pred_check_branch
      %26 = sbr.rel (0) target = $region21
    $region20: #{tpu_custom_call.1} parent=1 // pred_region
      _
    $region21: #{tpu_custom_call.1} parent=1 // pred_fallthru
      _
    // Predicated region
    $region22: #{tpu_custom_call.1} parent=1 // pred_check
      _
    $region23: #{tpu_custom_call.1} parent=1 // pred_check_branch
      %28 = sbr.rel (0) target = $region25
    $region24: #{tpu_custom_call.1} parent=1 // pred_region
      _
    $region25: #{tpu_custom_call.1} parent=1 // pred_fallthru
      _
    // Predicated region
    $region26: #{tpu_custom_call.1} parent=1 // pred_check
      _
    $region27: #{tpu_custom_call.1} parent=1 // pred_check_branch
      %30 = sbr.rel (0) target = $region29
    $region28: #{tpu_custom_call.1} parent=1 // pred_region
      _
    $region29: #{tpu_custom_call.1} parent=1 // pred_fallthru
      _
    // Predicated region
    $region30: #{tpu_custom_call.1} parent=1 // pred_check
      _
    $region31: #{tpu_custom_call.1} parent=1 // pred_check_branch
      %32 = sbr.rel (0) target = $region33
    $region32: #{tpu_custom_call.1} parent=1 // pred_region
      _
    $region33: #{tpu_custom_call.1} parent=1 // pred_fallthru
      _
    // Predicated region
    $region34: #{tpu_custom_call.1} parent=1 // pred_check
      _
    $region35: #{tpu_custom_call.1} parent=1 // pred_check_branch
      %34 = sbr.rel (0) target = $region37
    $region36: #{tpu_custom_call.1} parent=1 // pred_region
      _
    $region37: #{tpu_custom_call.1} parent=1 // pred_fallthru
      _
    %v35 = vld [vmem:[%s0] ss:$2 sm:$0x3]
    %s36 = scalar_lea.vmem %s0, 1
    %v37 = vld [vmem:[%s36] ss:$2 sm:$0x3]
    %v38 = vmul.f32 %v35, %v35
    %v39 = vmul.f32 %v37, %v37
    %v40 = vadd.f32 %v38, %v39
    %v41 = vrsqrt.pop %v40
    %v42 = vmul.f32 %v40, %v41
    %vm43 = vcmp.eq.f32.partialorder %v40, inf
    %v44 = vsel %vm43, %v40, %v42
    %vm45 = vcmp.eq.f32.partialorder %v40, 0.0
    %v46 = vand.u32 %v40, 2147483648
    %v47 = vsel %vm45, %v46, %v44
    %v48 = vld [vmem:[%s1] sm:$0xff]
    %v49 = vld [vmem:[%s1 + $0x8] sm:$0xff]
    %v50 = vld [vmem:[%s1 + $0x10] sm:$0xff]
    %v51 = vld [vmem:[%s1 + $0x18] sm:$0xff]
    %53 = vset.pattern.permute.xlu0 0
    %54 = vperm.xlu0 %53, %v48
    %v55 = vpop.permute.xlu0 %54
    %58 = vset.pattern.permute.xlu0 0
    %59 = vperm.xlu0 %58, %v49
    %v60 = vpop.permute.xlu0 %59
    %63 = vset.pattern.permute.xlu0 0
    %64 = vperm.xlu0 %63, %v50
    %v65 = vpop.permute.xlu0 %64
    %68 = vset.pattern.permute.xlu0 0
    %69 = vperm.xlu0 %68, %v51
    %v70 = vpop.permute.xlu0 %69
    %v73 = vlaneseq
    %v74 = vshrl.u32 %v73, 7
    %v75 = vsub.s32 0, %v74
    %v76 = vrot.slane %v35, %v75
    %v77 = vlaneseq
    %v78 = vshrl.u32 %v77, 7
    %v79 = vsub.s32 1, %v78
    %v80 = vrot.slane %v35, %v79
    %v83 = vmul.f32 %v55, %v76
    %v84 = vmul.f32 %v55, %v80
    %v85 = vmul.f32 %v60, %v76
    %v86 = vmul.f32 %v60, %v80
    %v87 = vmul.f32 %v65, %v76
    %v88 = vmul.f32 %v65, %v80
    %v89 = vmul.f32 %v70, %v76
    %v90 = vmul.f32 %v70, %v80
    %91 = vset.pattern.permute.xlu0 1
    %92 = vperm.xlu0 %91, %v48
    %v93 = vpop.permute.xlu0 %92
    %95 = vset.pattern.permute.xlu0 1
    %96 = vperm.xlu0 %95, %v49
    %v97 = vpop.permute.xlu0 %96
    %99 = vset.pattern.permute.xlu0 1
    %100 = vperm.xlu0 %99, %v50
    %v101 = vpop.permute.xlu0 %100
    %103 = vset.pattern.permute.xlu0 1
    %104 = vperm.xlu0 %103, %v51
    %v105 = vpop.permute.xlu0 %104
    %v108 = vlaneseq
    %v109 = vshrl.u32 %v108, 7
    %v110 = vsub.s32 0, %v109
    %v111 = vrot.slane %v37, %v110
    %v112 = vlaneseq
    %v113 = vshrl.u32 %v112, 7
    %v114 = vsub.s32 1, %v113
    %v115 = vrot.slane %v37, %v114
    %v118 = vmul.f32 %v93, %v111
    %v119 = vmul.f32 %v93, %v115
    %v120 = vmul.f32 %v97, %v111
    %v121 = vmul.f32 %v97, %v115
    %v122 = vmul.f32 %v101, %v111
    %v123 = vmul.f32 %v101, %v115
    %v124 = vmul.f32 %v105, %v111
    %v125 = vmul.f32 %v105, %v115
    %v126 = vadd.f32 %v83, %v118
    %v127 = vadd.f32 %v84, %v119
    %v128 = vadd.f32 %v85, %v120
    %v129 = vadd.f32 %v86, %v121
    %v130 = vadd.f32 %v87, %v122
    %v131 = vadd.f32 %v88, %v123
    %v132 = vadd.f32 %v89, %v124
    %v133 = vadd.f32 %v90, %v125
    %v134 = vld [vmem:[%s2] sm:$0xff]
    %v135 = vld [vmem:[%s2 + $0x8] sm:$0xff]
    %v136 = vld [vmem:[%s2 + $0x10] sm:$0xff]
    %v137 = vld [vmem:[%s2 + $0x18] sm:$0xff]
    %139 = vset.pattern.permute.xlu0 0
    %140 = vperm.xlu0 %139, %v134
    %v141 = vpop.permute.xlu0 %140
    %144 = vset.pattern.permute.xlu0 0
    %145 = vperm.xlu0 %144, %v135
    %v146 = vpop.permute.xlu0 %145
    %149 = vset.pattern.permute.xlu0 0
    %150 = vperm.xlu0 %149, %v136
    %v151 = vpop.permute.xlu0 %150
    %154 = vset.pattern.permute.xlu0 0
    %155 = vperm.xlu0 %154, %v137
    %v156 = vpop.permute.xlu0 %155
    %v158 = vadd.f32 %v126, %v141
    %v159 = vadd.f32 %v127, %v141
    %v160 = vadd.f32 %v128, %v146
    %v161 = vadd.f32 %v129, %v146
    %v162 = vadd.f32 %v130, %v151
    %v163 = vadd.f32 %v131, %v151
    %v164 = vadd.f32 %v132, %v156
    %v165 = vadd.f32 %v133, %v156
    %v166 = vmax.f32 %v158, 0.0
    %v167 = vmax.f32 %v159, 0.0
    %v168 = vmax.f32 %v160, 0.0
    %v169 = vmax.f32 %v161, 0.0
    %v170 = vmax.f32 %v162, 0.0
    %v171 = vmax.f32 %v163, 0.0
    %v172 = vmax.f32 %v164, 0.0
    %v173 = vmax.f32 %v165, 0.0
    %v174 = vld [vmem:[%s3] sm:$0xff]
    %v175 = vld [vmem:[%s3 + $0x8] sm:$0xff]
    %v176 = vld [vmem:[%s3 + $0x10] sm:$0xff]
    %v177 = vld [vmem:[%s3 + $0x18] sm:$0xff]
    %v178 = vld [vmem:[%s4] sm:$0xff]
    %v179 = vld [vmem:[%s4 + $0x8] sm:$0xff]
    %v180 = vld [vmem:[%s4 + $0x10] sm:$0xff]
    %v181 = vld [vmem:[%s4 + $0x18] sm:$0xff]
    %183 = vset.pattern.permute.xlu0 0
    %184 = vperm.xlu0 %183, %v178
    %v185 = vpop.permute.xlu0 %184
    %188 = vset.pattern.permute.xlu0 0
    %189 = vperm.xlu0 %188, %v179
    %v190 = vpop.permute.xlu0 %189
    %193 = vset.pattern.permute.xlu0 0
    %194 = vperm.xlu0 %193, %v180
    %v195 = vpop.permute.xlu0 %194
    %198 = vset.pattern.permute.xlu0 0
    %199 = vperm.xlu0 %198, %v181
    %v200 = vpop.permute.xlu0 %199
    %vm202 = vcmask 261120
    %v204 = vsel %vm202, %v174, 0
    %v207 = vsel %vm202, %v175, 0
    %v210 = vsel %vm202, %v176, 0
    %v213 = vsel %vm202, %v177, 0
    %215 = vmatprep.subr.mxu0 %v167
    %216 = vmatpush1.msra.mxu0 %v166
    %217 = vmatprep.subr.mxu0 %v169
    %218 = vmatpush1.msra.mxu0 %v168
    %219 = vmatprep.subr.mxu0 %v171
    %220 = vmatpush1.msra.mxu0 %v170
    %221 = vmatprep.subr.mxu0 %v173
    %222 = vmatpush1.msra.mxu0 %v172
    %223 = vmatprep.subr.mxu0 0.0
    %224 = vmatpush1.msra.mxu0 0.0
    %225 = vmatprep.subr.mxu0 0.0
    %226 = vmatpush1.msra.mxu0 0.0
    %227 = vmatprep.subr.mxu0 0.0
    %228 = vmatpush1.msra.mxu0 0.0
    %229 = vmatprep.subr.mxu0 0.0
    %230 = vmatpush1.msra.mxu0 0.0
    %231 = vmatprep.subr.mxu0 0.0
    %232 = vmatpush1.msra.mxu0 0.0
    %233 = vmatprep.subr.mxu0 0.0
    %234 = vmatpush1.msra.mxu0 0.0
    %235 = vmatprep.subr.mxu0 0.0
    %236 = vmatpush1.msra.mxu0 0.0
    %237 = vmatprep.subr.mxu0 0.0
    %238 = vmatpush1.msra.mxu0 0.0
    %239 = vmatprep.subr.mxu0 0.0
    %240 = vmatpush1.msra.mxu0 0.0
    %241 = vmatprep.subr.mxu0 0.0
    %242 = vmatpush1.msra.mxu0 0.0
    %243 = vmatprep.subr.mxu0 0.0
    %244 = vmatpush1.msra.mxu0 0.0
    %245 = vmatprep.subr.mxu0 0.0
    %246 = vmatpush1.msra.mxu0 0.0
    %247 = vmatprep.subr.mxu0 0.0
    %248 = vmatpush1.msra.mxu0 0.0
    %249 = vmatprep.subr.mxu0 0.0
    %250 = vmatpush1.msra.mxu0 0.0
    %251 = vmatprep.subr.mxu0 0.0
    %252 = vmatpush1.msra.mxu0 0.0
    %253 = vmatprep.subr.mxu0 0.0
    %254 = vmatpush1.msra.mxu0 0.0
    %255 = vmatprep.subr.mxu0 0.0
    %256 = vmatpush1.msra.mxu0 0.0
    %257 = vmatprep.subr.mxu0 0.0
    %258 = vmatpush1.msra.mxu0 0.0
    %259 = vmatprep.subr.mxu0 0.0
    %260 = vmatpush1.msra.mxu0 0.0
    %261 = vmatprep.subr.mxu0 0.0
    %262 = vmatpush1.msra.mxu0 0.0
    %263 = vmatprep.subr.mxu0 0.0
    %264 = vmatpush1.msra.mxu0 0.0
    %265 = vmatprep.subr.mxu0 0.0
    %266 = vmatpush1.msra.mxu0 0.0
    %267 = vmatprep.subr.mxu0 0.0
    %268 = vmatpush1.msra.mxu0 0.0
    %269 = vmatprep.subr.mxu0 0.0
    %270 = vmatpush1.msra.mxu0 0.0
    %271 = vmatprep.subr.mxu0 0.0
    %272 = vmatpush1.msra.mxu0 0.0
    %273 = vmatprep.subr.mxu0 0.0
    %274 = vmatpush1.msra.mxu0 0.0
    %275 = vmatprep.subr.mxu0 0.0
    %276 = vmatpush1.msra.mxu0 0.0
    %277 = vmatprep.subr.mxu0 0.0
    %278 = vmatpush1.msra.mxu0 0.0
    %279 = vmatprep.mubr.f32.mxu0 0.0
    %280 = vmatmul.mubr.f32.gmra.mrb[0].mxu0 %v204
    %v281 = vpop.f32.mrb[0].mxu0
    %v282 = vadd.f32 %v185, %v281
    %v283 = vpop.f32.mrb[0].mxu0
    %v284 = vadd.f32 %v185, %v283
    %285 = vmatprep.mubr.f32.mxu0 0.0
    %286 = vmatmul.mubr.f32.gmra.mrb[0].mxu0 %v207
    %v287 = vpop.f32.mrb[0].mxu0
    %v288 = vadd.f32 %v190, %v287
    %v289 = vpop.f32.mrb[0].mxu0
    %v290 = vadd.f32 %v190, %v289
    %291 = vmatprep.mubr.f32.mxu0 0.0
    %292 = vmatmul.mubr.f32.gmra.mrb[0].mxu0 %v210
    %v293 = vpop.f32.mrb[0].mxu0
    %v294 = vadd.f32 %v195, %v293
    %v295 = vpop.f32.mrb[0].mxu0
    %v296 = vadd.f32 %v195, %v295
    %297 = vmatprep.mubr.f32.mxu0 0.0
    %298 = vmatmul.mubr.f32.gmra.mrb[0].mxu0 %v213
    %v299 = vpop.f32.mrb[0].mxu0
    %v300 = vadd.f32 %v200, %v299
    %v301 = vpop.f32.mrb[0].mxu0
    %v302 = vadd.f32 %v200, %v301
    %303 = vdwg.mxu0
    %v304 = vadd.f32 %v282, %v284
    %305 = vadd.xlane.f32.xlu0 %v304
    %v306 = vpop.xlane.xlu0 %305
    %v307 = vadd.f32 %v288, %v290
    %308 = vadd.xlane.f32.xlu0 %v307
    %v309 = vpop.xlane.xlu0 %308
    %v310 = vadd.f32 %v294, %v296
    %311 = vadd.xlane.f32.xlu0 %v310
    %v312 = vpop.xlane.xlu0 %311
    %v313 = vadd.f32 %v300, %v302
    %314 = vadd.xlane.f32.xlu0 %v313
    %v315 = vpop.xlane.xlu0 %314
    %v316 = vmul.f32 %v282, %v282
    %v317 = vmul.f32 %v284, %v284
    %v318 = vmul.f32 %v288, %v288
    %v319 = vmul.f32 %v290, %v290
    %v320 = vmul.f32 %v294, %v294
    %v321 = vmul.f32 %v296, %v296
    %v322 = vmul.f32 %v300, %v300
    %v323 = vmul.f32 %v302, %v302
    %v324 = vadd.f32 %v316, %v317
    %325 = vadd.xlane.f32.xlu0 %v324
    %v326 = vpop.xlane.xlu0 %325
    %v327 = vadd.f32 %v318, %v319
    %328 = vadd.xlane.f32.xlu0 %v327
    %v329 = vpop.xlane.xlu0 %328
    %v330 = vadd.f32 %v320, %v321
    %331 = vadd.xlane.f32.xlu0 %v330
    %v332 = vpop.xlane.xlu0 %331
    %v333 = vadd.f32 %v322, %v323
    %334 = vadd.xlane.f32.xlu0 %v333
    %v335 = vpop.xlane.xlu0 %334
    %v336 = vmul.f32 %v306, 0.00390625
    %v337 = vmul.f32 %v309, 0.00390625
    %v338 = vmul.f32 %v312, 0.00390625
    %v339 = vmul.f32 %v315, 0.00390625
    %v340 = vmul.f32 %v326, 0.00390625
    %v341 = vmul.f32 %v329, 0.00390625
    %v342 = vmul.f32 %v332, 0.00390625
    %v343 = vmul.f32 %v335, 0.00390625
    %v344 = vmul.f32 %v336, %v336
    %v345 = vmul.f32 %v337, %v337
    %v346 = vmul.f32 %v338, %v338
    %v347 = vmul.f32 %v339, %v339
    %v348 = vsub.f32 %v340, %v344
    %v349 = vsub.f32 %v341, %v345
    %v350 = vsub.f32 %v342, %v346
    %v351 = vsub.f32 %v343, %v347
    %v352 = vmax.f32 %v348, 0.0
    %v353 = vmax.f32 %v349, 0.0
    %v354 = vmax.f32 %v350, 0.0
    %v355 = vmax.f32 %v351, 0.0
    %v356 = vld [vmem:[%s5] sm:$0xff]
    %v357 = vld [vmem:[%s5 + $0x8] sm:$0xff]
    %v358 = vld [vmem:[%s5 + $0x10] sm:$0xff]
    %v359 = vld [vmem:[%s5 + $0x18] sm:$0xff]
    %v360 = vadd.f32 %v352, 1e-05
    %v361 = vadd.f32 %v353, 1e-05
    %v362 = vadd.f32 %v354, 1e-05
    %v363 = vadd.f32 %v355, 1e-05
    %v364 = vrsqrt.pop %v360
    %v365 = vrsqrt.pop %v361
    %v366 = vrsqrt.pop %v362
    %v367 = vrsqrt.pop %v363
    %v368 = vmul.f32 %v356, %v364
    %v369 = vmul.f32 %v357, %v365
    %v370 = vmul.f32 %v358, %v366
    %v371 = vmul.f32 %v359, %v367
    %v372 = vld [vmem:[%s6] sm:$0xff]
    %v373 = vld [vmem:[%s6 + $0x8] sm:$0xff]
    %v374 = vld [vmem:[%s6 + $0x10] sm:$0xff]
    %v375 = vld [vmem:[%s6 + $0x18] sm:$0xff]
    %v376 = vmul.f32 %v336, %v368
    %v377 = vmul.f32 %v337, %v369
    %v378 = vmul.f32 %v338, %v370
    %v379 = vmul.f32 %v339, %v371
    %v380 = vsub.f32 %v372, %v376
    %v381 = vsub.f32 %v373, %v377
    %v382 = vsub.f32 %v374, %v378
    %v383 = vsub.f32 %v375, %v379
    %385 = vset.pattern.permute.xlu0 0
    %386 = vperm.xlu0 %385, %v368
    %v387 = vpop.permute.xlu0 %386
    %390 = vset.pattern.permute.xlu0 0
    %391 = vperm.xlu0 %390, %v369
    %v392 = vpop.permute.xlu0 %391
    %395 = vset.pattern.permute.xlu0 0
    %396 = vperm.xlu0 %395, %v370
    %v397 = vpop.permute.xlu0 %396
    %400 = vset.pattern.permute.xlu0 0
    %401 = vperm.xlu0 %400, %v371
    %v402 = vpop.permute.xlu0 %401
    %v404 = vmul.f32 %v282, %v387
    %v405 = vmul.f32 %v284, %v387
    %v406 = vmul.f32 %v288, %v392
    %v407 = vmul.f32 %v290, %v392
    %v408 = vmul.f32 %v294, %v397
    %v409 = vmul.f32 %v296, %v397
    %v410 = vmul.f32 %v300, %v402
    %v411 = vmul.f32 %v302, %v402
    %413 = vset.pattern.permute.xlu0 0
    %414 = vperm.xlu0 %413, %v380
    %v415 = vpop.permute.xlu0 %414
    %418 = vset.pattern.permute.xlu0 0
    %419 = vperm.xlu0 %418, %v381
    %v420 = vpop.permute.xlu0 %419
    %423 = vset.pattern.permute.xlu0 0
    %424 = vperm.xlu0 %423, %v382
    %v425 = vpop.permute.xlu0 %424
    %428 = vset.pattern.permute.xlu0 0
    %429 = vperm.xlu0 %428, %v383
    %v430 = vpop.permute.xlu0 %429
    %v432 = vadd.f32 %v404, %v415
    %v433 = vadd.f32 %v405, %v415
    %v434 = vadd.f32 %v406, %v420
    %v435 = vadd.f32 %v407, %v420
    %v436 = vadd.f32 %v408, %v425
    %v437 = vadd.f32 %v409, %v425
    %v438 = vadd.f32 %v410, %v430
    %v439 = vadd.f32 %v411, %v430
    %v440 = vmax.f32 %v432, 0.0
    %v441 = vmax.f32 %v433, 0.0
    %v442 = vmax.f32 %v434, 0.0
    %v443 = vmax.f32 %v435, 0.0
    %v444 = vmax.f32 %v436, 0.0
    %v445 = vmax.f32 %v437, 0.0
    %v446 = vmax.f32 %v438, 0.0
    %v447 = vmax.f32 %v439, 0.0
    %s448 = scalar_lea.vmem %s3, 32
    %v449 = vld [vmem:[%s448] sm:$0xff]
    %v450 = vld [vmem:[%s448 + $0x8] sm:$0xff]
    %v451 = vld [vmem:[%s448 + $0x10] sm:$0xff]
    %v452 = vld [vmem:[%s448 + $0x18] sm:$0xff]
    %s453 = scalar_lea.vmem %s4, 32
    %v454 = vld [vmem:[%s453] sm:$0xff]
    %v455 = vld [vmem:[%s453 + $0x8] sm:$0xff]
    %v456 = vld [vmem:[%s453 + $0x10] sm:$0xff]
    %v457 = vld [vmem:[%s453 + $0x18] sm:$0xff]
    %459 = vset.pattern.permute.xlu0 0
    %460 = vperm.xlu0 %459, %v454
    %v461 = vpop.permute.xlu0 %460
    %464 = vset.pattern.permute.xlu0 0
    %465 = vperm.xlu0 %464, %v455
    %v466 = vpop.permute.xlu0 %465
    %469 = vset.pattern.permute.xlu0 0
    %470 = vperm.xlu0 %469, %v456
    %v471 = vpop.permute.xlu0 %470
    %474 = vset.pattern.permute.xlu0 0
    %475 = vperm.xlu0 %474, %v457
    %v476 = vpop.permute.xlu0 %475
    %v479 = vsel %vm202, %v449, 0
    %v482 = vsel %vm202, %v450, 0
    %v485 = vsel %vm202, %v451, 0
    %v488 = vsel %vm202, %v452, 0
    %490 = vmatprep.subr.mxu0 %v441
    %491 = vmatpush1.msra.mxu0 %v440
    %492 = vmatprep.subr.mxu0 %v443
    %493 = vmatpush1.msra.mxu0 %v442
    %494 = vmatprep.subr.mxu0 %v445
    %495 = vmatpush1.msra.mxu0 %v444
    %496 = vmatprep.subr.mxu0 %v447
    %497 = vmatpush1.msra.mxu0 %v446
    %498 = vmatprep.subr.mxu0 0.0
    %499 = vmatpush1.msra.mxu0 0.0
    %500 = vmatprep.subr.mxu0 0.0
    %501 = vmatpush1.msra.mxu0 0.0
    %502 = vmatprep.subr.mxu0 0.0
    %503 = vmatpush1.msra.mxu0 0.0
    %504 = vmatprep.subr.mxu0 0.0
    %505 = vmatpush1.msra.mxu0 0.0
    %506 = vmatprep.subr.mxu0 0.0
    %507 = vmatpush1.msra.mxu0 0.0
    %508 = vmatprep.subr.mxu0 0.0
    %509 = vmatpush1.msra.mxu0 0.0
    %510 = vmatprep.subr.mxu0 0.0
    %511 = vmatpush1.msra.mxu0 0.0
    %512 = vmatprep.subr.mxu0 0.0
    %513 = vmatpush1.msra.mxu0 0.0
    %514 = vmatprep.subr.mxu0 0.0
    %515 = vmatpush1.msra.mxu0 0.0
    %516 = vmatprep.subr.mxu0 0.0
    %517 = vmatpush1.msra.mxu0 0.0
    %518 = vmatprep.subr.mxu0 0.0
    %519 = vmatpush1.msra.mxu0 0.0
    %520 = vmatprep.subr.mxu0 0.0
    %521 = vmatpush1.msra.mxu0 0.0
    %522 = vmatprep.subr.mxu0 0.0
    %523 = vmatpush1.msra.mxu0 0.0
    %524 = vmatprep.subr.mxu0 0.0
    %525 = vmatpush1.msra.mxu0 0.0
    %526 = vmatprep.subr.mxu0 0.0
    %527 = vmatpush1.msra.mxu0 0.0
    %528 = vmatprep.subr.mxu0 0.0
    %529 = vmatpush1.msra.mxu0 0.0
    %530 = vmatprep.subr.mxu0 0.0
    %531 = vmatpush1.msra.mxu0 0.0
    %532 = vmatprep.subr.mxu0 0.0
    %533 = vmatpush1.msra.mxu0 0.0
    %534 = vmatprep.subr.mxu0 0.0
    %535 = vmatpush1.msra.mxu0 0.0
    %536 = vmatprep.subr.mxu0 0.0
    %537 = vmatpush1.msra.mxu0 0.0
    %538 = vmatprep.subr.mxu0 0.0
    %539 = vmatpush1.msra.mxu0 0.0
    %540 = vmatprep.subr.mxu0 0.0
    %541 = vmatpush1.msra.mxu0 0.0
    %542 = vmatprep.subr.mxu0 0.0
    %543 = vmatpush1.msra.mxu0 0.0
    %544 = vmatprep.subr.mxu0 0.0
    %545 = vmatpush1.msra.mxu0 0.0
    %546 = vmatprep.subr.mxu0 0.0
    %547 = vmatpush1.msra.mxu0 0.0
    %548 = vmatprep.subr.mxu0 0.0
    %549 = vmatpush1.msra.mxu0 0.0
    %550 = vmatprep.subr.mxu0 0.0
    %551 = vmatpush1.msra.mxu0 0.0
    %552 = vmatprep.subr.mxu0 0.0
    %553 = vmatpush1.msra.mxu0 0.0
    %554 = vmatprep.mubr.f32.mxu0 0.0
    %555 = vmatmul.mubr.f32.gmra.mrb[0].mxu0 %v479
    %v556 = vpop.f32.mrb[0].mxu0
    %v557 = vadd.f32 %v461, %v556
    %v558 = vpop.f32.mrb[0].mxu0
    %v559 = vadd.f32 %v461, %v558
    %560 = vmatprep.mubr.f32.mxu0 0.0
    %561 = vmatmul.mubr.f32.gmra.mrb[0].mxu0 %v482
    %v562 = vpop.f32.mrb[0].mxu0
    %v563 = vadd.f32 %v466, %v562
    %v564 = vpop.f32.mrb[0].mxu0
    %v565 = vadd.f32 %v466, %v564
    %566 = vmatprep.mubr.f32.mxu0 0.0
    %567 = vmatmul.mubr.f32.gmra.mrb[0].mxu0 %v485
    %v568 = vpop.f32.mrb[0].mxu0
    %v569 = vadd.f32 %v471, %v568
    %v570 = vpop.f32.mrb[0].mxu0
    %v571 = vadd.f32 %v471, %v570
    %572 = vmatprep.mubr.f32.mxu0 0.0
    %573 = vmatmul.mubr.f32.gmra.mrb[0].mxu0 %v488
    %v574 = vpop.f32.mrb[0].mxu0
    %v575 = vadd.f32 %v476, %v574
    %v576 = vpop.f32.mrb[0].mxu0
    %v577 = vadd.f32 %v476, %v576
    %578 = vdwg.mxu0
    %v579 = vadd.f32 %v557, %v559
    %580 = vadd.xlane.f32.xlu0 %v579
    %v581 = vpop.xlane.xlu0 %580
    %v582 = vadd.f32 %v563, %v565
    %583 = vadd.xlane.f32.xlu0 %v582
    %v584 = vpop.xlane.xlu0 %583
    %v585 = vadd.f32 %v569, %v571
    %586 = vadd.xlane.f32.xlu0 %v585
    %v587 = vpop.xlane.xlu0 %586
    %v588 = vadd.f32 %v575, %v577
    %589 = vadd.xlane.f32.xlu0 %v588
    %v590 = vpop.xlane.xlu0 %589
    %v591 = vmul.f32 %v557, %v557
    %v592 = vmul.f32 %v559, %v559
    %v593 = vmul.f32 %v563, %v563
    %v594 = vmul.f32 %v565, %v565
    %v595 = vmul.f32 %v569, %v569
    %v596 = vmul.f32 %v571, %v571
    %v597 = vmul.f32 %v575, %v575
    %v598 = vmul.f32 %v577, %v577
    %v599 = vadd.f32 %v591, %v592
    %600 = vadd.xlane.f32.xlu0 %v599
    %v601 = vpop.xlane.xlu0 %600
    %v602 = vadd.f32 %v593, %v594
    %603 = vadd.xlane.f32.xlu0 %v602
    %v604 = vpop.xlane.xlu0 %603
    %v605 = vadd.f32 %v595, %v596
    %606 = vadd.xlane.f32.xlu0 %v605
    %v607 = vpop.xlane.xlu0 %606
    %v608 = vadd.f32 %v597, %v598
    %609 = vadd.xlane.f32.xlu0 %v608
    %v610 = vpop.xlane.xlu0 %609
    %v611 = vmul.f32 %v581, 0.00390625
    %v612 = vmul.f32 %v584, 0.00390625
    %v613 = vmul.f32 %v587, 0.00390625
    %v614 = vmul.f32 %v590, 0.00390625
    %v615 = vmul.f32 %v601, 0.00390625
    %v616 = vmul.f32 %v604, 0.00390625
    %v617 = vmul.f32 %v607, 0.00390625
    %v618 = vmul.f32 %v610, 0.00390625
    %v619 = vmul.f32 %v611, %v611
    %v620 = vmul.f32 %v612, %v612
    %v621 = vmul.f32 %v613, %v613
    %v622 = vmul.f32 %v614, %v614
    %v623 = vsub.f32 %v615, %v619
    %v624 = vsub.f32 %v616, %v620
    %v625 = vsub.f32 %v617, %v621
    %v626 = vsub.f32 %v618, %v622
    %v627 = vmax.f32 %v623, 0.0
    %v628 = vmax.f32 %v624, 0.0
    %v629 = vmax.f32 %v625, 0.0
    %v630 = vmax.f32 %v626, 0.0
    %s631 = scalar_lea.vmem %s5, 32
    %v632 = vld [vmem:[%s631] sm:$0xff]
    %v633 = vld [vmem:[%s631 + $0x8] sm:$0xff]
    %v634 = vld [vmem:[%s631 + $0x10] sm:$0xff]
    %v635 = vld [vmem:[%s631 + $0x18] sm:$0xff]
    %v636 = vadd.f32 %v627, 1e-05
    %v637 = vadd.f32 %v628, 1e-05
    %v638 = vadd.f32 %v629, 1e-05
    %v639 = vadd.f32 %v630, 1e-05
    %v640 = vrsqrt.pop %v636
    %v641 = vrsqrt.pop %v637
    %v642 = vrsqrt.pop %v638
    %v643 = vrsqrt.pop %v639
    %v644 = vmul.f32 %v632, %v640
    %v645 = vmul.f32 %v633, %v641
    %v646 = vmul.f32 %v634, %v642
    %v647 = vmul.f32 %v635, %v643
    %s648 = scalar_lea.vmem %s6, 32
    %v649 = vld [vmem:[%s648] sm:$0xff]
    %v650 = vld [vmem:[%s648 + $0x8] sm:$0xff]
    %v651 = vld [vmem:[%s648 + $0x10] sm:$0xff]
    %v652 = vld [vmem:[%s648 + $0x18] sm:$0xff]
    %v653 = vmul.f32 %v611, %v644
    %v654 = vmul.f32 %v612, %v645
    %v655 = vmul.f32 %v613, %v646
    %v656 = vmul.f32 %v614, %v647
    %v657 = vsub.f32 %v649, %v653
    %v658 = vsub.f32 %v650, %v654
    %v659 = vsub.f32 %v651, %v655
    %v660 = vsub.f32 %v652, %v656
    %662 = vset.pattern.permute.xlu0 0
    %663 = vperm.xlu0 %662, %v644
    %v664 = vpop.permute.xlu0 %663
    %667 = vset.pattern.permute.xlu0 0
    %668 = vperm.xlu0 %667, %v645
    %v669 = vpop.permute.xlu0 %668
    %672 = vset.pattern.permute.xlu0 0
    %673 = vperm.xlu0 %672, %v646
    %v674 = vpop.permute.xlu0 %673
    %677 = vset.pattern.permute.xlu0 0
    %678 = vperm.xlu0 %677, %v647
    %v679 = vpop.permute.xlu0 %678
    %v681 = vmul.f32 %v557, %v664
    %v682 = vmul.f32 %v559, %v664
    %v683 = vmul.f32 %v563, %v669
    %v684 = vmul.f32 %v565, %v669
    %v685 = vmul.f32 %v569, %v674
    %v686 = vmul.f32 %v571, %v674
    %v687 = vmul.f32 %v575, %v679
    %v688 = vmul.f32 %v577, %v679
    %690 = vset.pattern.permute.xlu0 0
    %691 = vperm.xlu0 %690, %v657
    %v692 = vpop.permute.xlu0 %691
    %695 = vset.pattern.permute.xlu0 0
    %696 = vperm.xlu0 %695, %v658
    %v697 = vpop.permute.xlu0 %696
    %700 = vset.pattern.permute.xlu0 0
    %701 = vperm.xlu0 %700, %v659
    %v702 = vpop.permute.xlu0 %701
    %705 = vset.pattern.permute.xlu0 0
    %706 = vperm.xlu0 %705, %v660
    %v707 = vpop.permute.xlu0 %706
    %v709 = vadd.f32 %v681, %v692
    %v710 = vadd.f32 %v682, %v692
    %v711 = vadd.f32 %v683, %v697
    %v712 = vadd.f32 %v684, %v697
    %v713 = vadd.f32 %v685, %v702
    %v714 = vadd.f32 %v686, %v702
    %v715 = vadd.f32 %v687, %v707
    %v716 = vadd.f32 %v688, %v707
    %v717 = vmax.f32 %v709, 0.0
    %v718 = vmax.f32 %v710, 0.0
    %v719 = vmax.f32 %v711, 0.0
    %v720 = vmax.f32 %v712, 0.0
    %v721 = vmax.f32 %v713, 0.0
    %v722 = vmax.f32 %v714, 0.0
    %v723 = vmax.f32 %v715, 0.0
    %v724 = vmax.f32 %v716, 0.0
    %s725 = scalar_lea.vmem %s3, 64
    %v726 = vld [vmem:[%s725] sm:$0xff]
    %v727 = vld [vmem:[%s725 + $0x8] sm:$0xff]
    %v728 = vld [vmem:[%s725 + $0x10] sm:$0xff]
    %v729 = vld [vmem:[%s725 + $0x18] sm:$0xff]
    %s730 = scalar_lea.vmem %s4, 64
    %v731 = vld [vmem:[%s730] sm:$0xff]
    %v732 = vld [vmem:[%s730 + $0x8] sm:$0xff]
    %v733 = vld [vmem:[%s730 + $0x10] sm:$0xff]
    %v734 = vld [vmem:[%s730 + $0x18] sm:$0xff]
    %736 = vset.pattern.permute.xlu0 0
    %737 = vperm.xlu0 %736, %v731
    %v738 = vpop.permute.xlu0 %737
    %741 = vset.pattern.permute.xlu0 0
    %742 = vperm.xlu0 %741, %v732
    %v743 = vpop.permute.xlu0 %742
    %746 = vset.pattern.permute.xlu0 0
    %747 = vperm.xlu0 %746, %v733
    %v748 = vpop.permute.xlu0 %747
    %751 = vset.pattern.permute.xlu0 0
    %752 = vperm.xlu0 %751, %v734
    %v753 = vpop.permute.xlu0 %752
    %v756 = vsel %vm202, %v726, 0
    %v759 = vsel %vm202, %v727, 0
    %v762 = vsel %vm202, %v728, 0
    %v765 = vsel %vm202, %v729, 0
    %767 = vmatprep.subr.mxu0 %v718
    %768 = vmatpush1.msra.mxu0 %v717
    %769 = vmatprep.subr.mxu0 %v720
    %770 = vmatpush1.msra.mxu0 %v719
    %771 = vmatprep.subr.mxu0 %v722
    %772 = vmatpush1.msra.mxu0 %v721
    %773 = vmatprep.subr.mxu0 %v724
    %774 = vmatpush1.msra.mxu0 %v723
    %775 = vmatprep.subr.mxu0 0.0
    %776 = vmatpush1.msra.mxu0 0.0
    %777 = vmatprep.subr.mxu0 0.0
    %778 = vmatpush1.msra.mxu0 0.0
    %779 = vmatprep.subr.mxu0 0.0
    %780 = vmatpush1.msra.mxu0 0.0
    %781 = vmatprep.subr.mxu0 0.0
    %782 = vmatpush1.msra.mxu0 0.0
    %783 = vmatprep.subr.mxu0 0.0
    %784 = vmatpush1.msra.mxu0 0.0
    %785 = vmatprep.subr.mxu0 0.0
    %786 = vmatpush1.msra.mxu0 0.0
    %787 = vmatprep.subr.mxu0 0.0
    %788 = vmatpush1.msra.mxu0 0.0
    %789 = vmatprep.subr.mxu0 0.0
    %790 = vmatpush1.msra.mxu0 0.0
    %791 = vmatprep.subr.mxu0 0.0
    %792 = vmatpush1.msra.mxu0 0.0
    %793 = vmatprep.subr.mxu0 0.0
    %794 = vmatpush1.msra.mxu0 0.0
    %795 = vmatprep.subr.mxu0 0.0
    %796 = vmatpush1.msra.mxu0 0.0
    %797 = vmatprep.subr.mxu0 0.0
    %798 = vmatpush1.msra.mxu0 0.0
    %799 = vmatprep.subr.mxu0 0.0
    %800 = vmatpush1.msra.mxu0 0.0
    %801 = vmatprep.subr.mxu0 0.0
    %802 = vmatpush1.msra.mxu0 0.0
    %803 = vmatprep.subr.mxu0 0.0
    %804 = vmatpush1.msra.mxu0 0.0
    %805 = vmatprep.subr.mxu0 0.0
    %806 = vmatpush1.msra.mxu0 0.0
    %807 = vmatprep.subr.mxu0 0.0
    %808 = vmatpush1.msra.mxu0 0.0
    %809 = vmatprep.subr.mxu0 0.0
    %810 = vmatpush1.msra.mxu0 0.0
    %811 = vmatprep.subr.mxu0 0.0
    %812 = vmatpush1.msra.mxu0 0.0
    %813 = vmatprep.subr.mxu0 0.0
    %814 = vmatpush1.msra.mxu0 0.0
    %815 = vmatprep.subr.mxu0 0.0
    %816 = vmatpush1.msra.mxu0 0.0
    %817 = vmatprep.subr.mxu0 0.0
    %818 = vmatpush1.msra.mxu0 0.0
    %819 = vmatprep.subr.mxu0 0.0
    %820 = vmatpush1.msra.mxu0 0.0
    %821 = vmatprep.subr.mxu0 0.0
    %822 = vmatpush1.msra.mxu0 0.0
    %823 = vmatprep.subr.mxu0 0.0
    %824 = vmatpush1.msra.mxu0 0.0
    %825 = vmatprep.subr.mxu0 0.0
    %826 = vmatpush1.msra.mxu0 0.0
    %827 = vmatprep.subr.mxu0 0.0
    %828 = vmatpush1.msra.mxu0 0.0
    %829 = vmatprep.subr.mxu0 0.0
    %830 = vmatpush1.msra.mxu0 0.0
    %831 = vmatprep.mubr.f32.mxu0 0.0
    %832 = vmatmul.mubr.f32.gmra.mrb[0].mxu0 %v756
    %v833 = vpop.f32.mrb[0].mxu0
    %v834 = vadd.f32 %v738, %v833
    %v835 = vpop.f32.mrb[0].mxu0
    %v836 = vadd.f32 %v738, %v835
    %837 = vmatprep.mubr.f32.mxu0 0.0
    %838 = vmatmul.mubr.f32.gmra.mrb[0].mxu0 %v759
    %v839 = vpop.f32.mrb[0].mxu0
    %v840 = vadd.f32 %v743, %v839
    %v841 = vpop.f32.mrb[0].mxu0
    %v842 = vadd.f32 %v743, %v841
    %843 = vmatprep.mubr.f32.mxu0 0.0
    %844 = vmatmul.mubr.f32.gmra.mrb[0].mxu0 %v762
    %v845 = vpop.f32.mrb[0].mxu0
    %v846 = vadd.f32 %v748, %v845
    %v847 = vpop.f32.mrb[0].mxu0
    %v848 = vadd.f32 %v748, %v847
    %849 = vmatprep.mubr.f32.mxu0 0.0
    %850 = vmatmul.mubr.f32.gmra.mrb[0].mxu0 %v765
    %v851 = vpop.f32.mrb[0].mxu0
    %v852 = vadd.f32 %v753, %v851
    %v853 = vpop.f32.mrb[0].mxu0
    %v854 = vadd.f32 %v753, %v853
    %855 = vdwg.mxu0
    %v856 = vadd.f32 %v834, %v836
    %857 = vadd.xlane.f32.xlu0 %v856
    %v858 = vpop.xlane.xlu0 %857
    %v859 = vadd.f32 %v840, %v842
    %860 = vadd.xlane.f32.xlu0 %v859
    %v861 = vpop.xlane.xlu0 %860
    %v862 = vadd.f32 %v846, %v848
    %863 = vadd.xlane.f32.xlu0 %v862
    %v864 = vpop.xlane.xlu0 %863
    %v865 = vadd.f32 %v852, %v854
    %866 = vadd.xlane.f32.xlu0 %v865
    %v867 = vpop.xlane.xlu0 %866
    %v868 = vmul.f32 %v834, %v834
    %v869 = vmul.f32 %v836, %v836
    %v870 = vmul.f32 %v840, %v840
    %v871 = vmul.f32 %v842, %v842
    %v872 = vmul.f32 %v846, %v846
    %v873 = vmul.f32 %v848, %v848
    %v874 = vmul.f32 %v852, %v852
    %v875 = vmul.f32 %v854, %v854
    %v876 = vadd.f32 %v868, %v869
    %877 = vadd.xlane.f32.xlu0 %v876
    %v878 = vpop.xlane.xlu0 %877
    %v879 = vadd.f32 %v870, %v871
    %880 = vadd.xlane.f32.xlu0 %v879
    %v881 = vpop.xlane.xlu0 %880
    %v882 = vadd.f32 %v872, %v873
    %883 = vadd.xlane.f32.xlu0 %v882
    %v884 = vpop.xlane.xlu0 %883
    %v885 = vadd.f32 %v874, %v875
    %886 = vadd.xlane.f32.xlu0 %v885
    %v887 = vpop.xlane.xlu0 %886
    %v888 = vmul.f32 %v858, 0.00390625
    %v889 = vmul.f32 %v861, 0.00390625
    %v890 = vmul.f32 %v864, 0.00390625
    %v891 = vmul.f32 %v867, 0.00390625
    %v892 = vmul.f32 %v878, 0.00390625
    %v893 = vmul.f32 %v881, 0.00390625
    %v894 = vmul.f32 %v884, 0.00390625
    %v895 = vmul.f32 %v887, 0.00390625
    %v896 = vmul.f32 %v888, %v888
    %v897 = vmul.f32 %v889, %v889
    %v898 = vmul.f32 %v890, %v890
    %v899 = vmul.f32 %v891, %v891
    %v900 = vsub.f32 %v892, %v896
    %v901 = vsub.f32 %v893, %v897
    %v902 = vsub.f32 %v894, %v898
    %v903 = vsub.f32 %v895, %v899
    %v904 = vmax.f32 %v900, 0.0
    %v905 = vmax.f32 %v901, 0.0
    %v906 = vmax.f32 %v902, 0.0
    %v907 = vmax.f32 %v903, 0.0
    %s908 = scalar_lea.vmem %s5, 64
    %v909 = vld [vmem:[%s908] sm:$0xff]
    %v910 = vld [vmem:[%s908 + $0x8] sm:$0xff]
    %v911 = vld [vmem:[%s908 + $0x10] sm:$0xff]
    %v912 = vld [vmem:[%s908 + $0x18] sm:$0xff]
    %v913 = vadd.f32 %v904, 1e-05
    %v914 = vadd.f32 %v905, 1e-05
    %v915 = vadd.f32 %v906, 1e-05
    %v916 = vadd.f32 %v907, 1e-05
    %v917 = vrsqrt.pop %v913
    %v918 = vrsqrt.pop %v914
    %v919 = vrsqrt.pop %v915
    %v920 = vrsqrt.pop %v916
    %v921 = vmul.f32 %v909, %v917
    %v922 = vmul.f32 %v910, %v918
    %v923 = vmul.f32 %v911, %v919
    %v924 = vmul.f32 %v912, %v920
    %s925 = scalar_lea.vmem %s6, 64
    %v926 = vld [vmem:[%s925] sm:$0xff]
    %v927 = vld [vmem:[%s925 + $0x8] sm:$0xff]
    %v928 = vld [vmem:[%s925 + $0x10] sm:$0xff]
    %v929 = vld [vmem:[%s925 + $0x18] sm:$0xff]
    %v930 = vmul.f32 %v888, %v921
    %v931 = vmul.f32 %v889, %v922
    %v932 = vmul.f32 %v890, %v923
    %v933 = vmul.f32 %v891, %v924
    %v934 = vsub.f32 %v926, %v930
    %v935 = vsub.f32 %v927, %v931
    %v936 = vsub.f32 %v928, %v932
    %v937 = vsub.f32 %v929, %v933
    %939 = vset.pattern.permute.xlu0 0
    %940 = vperm.xlu0 %939, %v921
    %v941 = vpop.permute.xlu0 %940
    %944 = vset.pattern.permute.xlu0 0
    %945 = vperm.xlu0 %944, %v922
    %v946 = vpop.permute.xlu0 %945
    %949 = vset.pattern.permute.xlu0 0
    %950 = vperm.xlu0 %949, %v923
    %v951 = vpop.permute.xlu0 %950
    %954 = vset.pattern.permute.xlu0 0
    %955 = vperm.xlu0 %954, %v924
    %v956 = vpop.permute.xlu0 %955
    %v958 = vmul.f32 %v834, %v941
    %v959 = vmul.f32 %v836, %v941
    %v960 = vmul.f32 %v840, %v946
    %v961 = vmul.f32 %v842, %v946
    %v962 = vmul.f32 %v846, %v951
    %v963 = vmul.f32 %v848, %v951
    %v964 = vmul.f32 %v852, %v956
    %v965 = vmul.f32 %v854, %v956
    %967 = vset.pattern.permute.xlu0 0
    %968 = vperm.xlu0 %967, %v934
    %v969 = vpop.permute.xlu0 %968
    %972 = vset.pattern.permute.xlu0 0
    %973 = vperm.xlu0 %972, %v935
    %v974 = vpop.permute.xlu0 %973
    %977 = vset.pattern.permute.xlu0 0
    %978 = vperm.xlu0 %977, %v936
    %v979 = vpop.permute.xlu0 %978
    %982 = vset.pattern.permute.xlu0 0
    %983 = vperm.xlu0 %982, %v937
    %v984 = vpop.permute.xlu0 %983
    %v986 = vadd.f32 %v958, %v969
    %v987 = vadd.f32 %v959, %v969
    %v988 = vadd.f32 %v960, %v974
    %v989 = vadd.f32 %v961, %v974
    %v990 = vadd.f32 %v962, %v979
    %v991 = vadd.f32 %v963, %v979
    %v992 = vadd.f32 %v964, %v984
    %v993 = vadd.f32 %v965, %v984
    %v994 = vmax.f32 %v986, 0.0
    %v995 = vmax.f32 %v987, 0.0
    %v996 = vmax.f32 %v988, 0.0
    %v997 = vmax.f32 %v989, 0.0
    %v998 = vmax.f32 %v990, 0.0
    %v999 = vmax.f32 %v991, 0.0
    %v1000 = vmax.f32 %v992, 0.0
    %v1001 = vmax.f32 %v993, 0.0
    %s1002 = scalar_lea.vmem %s3, 96
    %v1003 = vld [vmem:[%s1002] sm:$0xff]
    %v1004 = vld [vmem:[%s1002 + $0x8] sm:$0xff]
    %v1005 = vld [vmem:[%s1002 + $0x10] sm:$0xff]
    %v1006 = vld [vmem:[%s1002 + $0x18] sm:$0xff]
    %s1007 = scalar_lea.vmem %s4, 96
    %v1008 = vld [vmem:[%s1007] sm:$0xff]
    %v1009 = vld [vmem:[%s1007 + $0x8] sm:$0xff]
    %v1010 = vld [vmem:[%s1007 + $0x10] sm:$0xff]
    %v1011 = vld [vmem:[%s1007 + $0x18] sm:$0xff]
    %1013 = vset.pattern.permute.xlu0 0
    %1014 = vperm.xlu0 %1013, %v1008
    %v1015 = vpop.permute.xlu0 %1014
    %1018 = vset.pattern.permute.xlu0 0
    %1019 = vperm.xlu0 %1018, %v1009
    %v1020 = vpop.permute.xlu0 %1019
    %1023 = vset.pattern.permute.xlu0 0
    %1024 = vperm.xlu0 %1023, %v1010
    %v1025 = vpop.permute.xlu0 %1024
    %1028 = vset.pattern.permute.xlu0 0
    %1029 = vperm.xlu0 %1028, %v1011
    %v1030 = vpop.permute.xlu0 %1029
    %v1033 = vsel %vm202, %v1003, 0
    %v1036 = vsel %vm202, %v1004, 0
    %v1039 = vsel %vm202, %v1005, 0
    %v1042 = vsel %vm202, %v1006, 0
    %1044 = vmatprep.subr.mxu0 %v995
    %1045 = vmatpush1.msra.mxu0 %v994
    %1046 = vmatprep.subr.mxu0 %v997
    %1047 = vmatpush1.msra.mxu0 %v996
    %1048 = vmatprep.subr.mxu0 %v999
    %1049 = vmatpush1.msra.mxu0 %v998
    %1050 = vmatprep.subr.mxu0 %v1001
    %1051 = vmatpush1.msra.mxu0 %v1000
    %1052 = vmatprep.subr.mxu0 0.0
    %1053 = vmatpush1.msra.mxu0 0.0
    %1054 = vmatprep.subr.mxu0 0.0
    %1055 = vmatpush1.msra.mxu0 0.0
    %1056 = vmatprep.subr.mxu0 0.0
    %1057 = vmatpush1.msra.mxu0 0.0
    %1058 = vmatprep.subr.mxu0 0.0
    %1059 = vmatpush1.msra.mxu0 0.0
    %1060 = vmatprep.subr.mxu0 0.0
    %1061 = vmatpush1.msra.mxu0 0.0
    %1062 = vmatprep.subr.mxu0 0.0
    %1063 = vmatpush1.msra.mxu0 0.0
    %1064 = vmatprep.subr.mxu0 0.0
    %1065 = vmatpush1.msra.mxu0 0.0
    %1066 = vmatprep.subr.mxu0 0.0
    %1067 = vmatpush1.msra.mxu0 0.0
    %1068 = vmatprep.subr.mxu0 0.0
    %1069 = vmatpush1.msra.mxu0 0.0
    %1070 = vmatprep.subr.mxu0 0.0
    %1071 = vmatpush1.msra.mxu0 0.0
    %1072 = vmatprep.subr.mxu0 0.0
    %1073 = vmatpush1.msra.mxu0 0.0
    %1074 = vmatprep.subr.mxu0 0.0
    %1075 = vmatpush1.msra.mxu0 0.0
    %1076 = vmatprep.subr.mxu0 0.0
    %1077 = vmatpush1.msra.mxu0 0.0
    %1078 = vmatprep.subr.mxu0 0.0
    %1079 = vmatpush1.msra.mxu0 0.0
    %1080 = vmatprep.subr.mxu0 0.0
    %1081 = vmatpush1.msra.mxu0 0.0
    %1082 = vmatprep.subr.mxu0 0.0
    %1083 = vmatpush1.msra.mxu0 0.0
    %1084 = vmatprep.subr.mxu0 0.0
    %1085 = vmatpush1.msra.mxu0 0.0
    %1086 = vmatprep.subr.mxu0 0.0
    %1087 = vmatpush1.msra.mxu0 0.0
    %1088 = vmatprep.subr.mxu0 0.0
    %1089 = vmatpush1.msra.mxu0 0.0
    %1090 = vmatprep.subr.mxu0 0.0
    %1091 = vmatpush1.msra.mxu0 0.0
    %1092 = vmatprep.subr.mxu0 0.0
    %1093 = vmatpush1.msra.mxu0 0.0
    %1094 = vmatprep.subr.mxu0 0.0
    %1095 = vmatpush1.msra.mxu0 0.0
    %1096 = vmatprep.subr.mxu0 0.0
    %1097 = vmatpush1.msra.mxu0 0.0
    %1098 = vmatprep.subr.mxu0 0.0
    %1099 = vmatpush1.msra.mxu0 0.0
    %1100 = vmatprep.subr.mxu0 0.0
    %1101 = vmatpush1.msra.mxu0 0.0
    %1102 = vmatprep.subr.mxu0 0.0
    %1103 = vmatpush1.msra.mxu0 0.0
    %1104 = vmatprep.subr.mxu0 0.0
    %1105 = vmatpush1.msra.mxu0 0.0
    %1106 = vmatprep.subr.mxu0 0.0
    %1107 = vmatpush1.msra.mxu0 0.0
    %1108 = vmatprep.mubr.f32.mxu0 0.0
    %1109 = vmatmul.mubr.f32.gmra.mrb[0].mxu0 %v1033
    %v1110 = vpop.f32.mrb[0].mxu0
    %v1111 = vadd.f32 %v1015, %v1110
    %v1112 = vpop.f32.mrb[0].mxu0
    %v1113 = vadd.f32 %v1015, %v1112
    %1114 = vmatprep.mubr.f32.mxu0 0.0
    %1115 = vmatmul.mubr.f32.gmra.mrb[0].mxu0 %v1036
    %v1116 = vpop.f32.mrb[0].mxu0
    %v1117 = vadd.f32 %v1020, %v1116
    %v1118 = vpop.f32.mrb[0].mxu0
    %v1119 = vadd.f32 %v1020, %v1118
    %1120 = vmatprep.mubr.f32.mxu0 0.0
    %1121 = vmatmul.mubr.f32.gmra.mrb[0].mxu0 %v1039
    %v1122 = vpop.f32.mrb[0].mxu0
    %v1123 = vadd.f32 %v1025, %v1122
    %v1124 = vpop.f32.mrb[0].mxu0
    %v1125 = vadd.f32 %v1025, %v1124
    %1126 = vmatprep.mubr.f32.mxu0 0.0
    %1127 = vmatmul.mubr.f32.gmra.mrb[0].mxu0 %v1042
    %v1128 = vpop.f32.mrb[0].mxu0
    %v1129 = vadd.f32 %v1030, %v1128
    %v1130 = vpop.f32.mrb[0].mxu0
    %v1131 = vadd.f32 %v1030, %v1130
    %1132 = vdwg.mxu0
    %v1133 = vadd.f32 %v1111, %v1113
    %1134 = vadd.xlane.f32.xlu0 %v1133
    %v1135 = vpop.xlane.xlu0 %1134
    %v1136 = vadd.f32 %v1117, %v1119
    %1137 = vadd.xlane.f32.xlu0 %v1136
    %v1138 = vpop.xlane.xlu0 %1137
    %v1139 = vadd.f32 %v1123, %v1125
    %1140 = vadd.xlane.f32.xlu0 %v1139
    %v1141 = vpop.xlane.xlu0 %1140
    %v1142 = vadd.f32 %v1129, %v1131
    %1143 = vadd.xlane.f32.xlu0 %v1142
    %v1144 = vpop.xlane.xlu0 %1143
    %v1145 = vmul.f32 %v1111, %v1111
    %v1146 = vmul.f32 %v1113, %v1113
    %v1147 = vmul.f32 %v1117, %v1117
    %v1148 = vmul.f32 %v1119, %v1119
    %v1149 = vmul.f32 %v1123, %v1123
    %v1150 = vmul.f32 %v1125, %v1125
    %v1151 = vmul.f32 %v1129, %v1129
    %v1152 = vmul.f32 %v1131, %v1131
    %v1153 = vadd.f32 %v1145, %v1146
    %1154 = vadd.xlane.f32.xlu0 %v1153
    %v1155 = vpop.xlane.xlu0 %1154
    %v1156 = vadd.f32 %v1147, %v1148
    %1157 = vadd.xlane.f32.xlu0 %v1156
    %v1158 = vpop.xlane.xlu0 %1157
    %v1159 = vadd.f32 %v1149, %v1150
    %1160 = vadd.xlane.f32.xlu0 %v1159
    %v1161 = vpop.xlane.xlu0 %1160
    %v1162 = vadd.f32 %v1151, %v1152
    %1163 = vadd.xlane.f32.xlu0 %v1162
    %v1164 = vpop.xlane.xlu0 %1163
    %v1165 = vmul.f32 %v1135, 0.00390625
    %v1166 = vmul.f32 %v1138, 0.00390625
    %v1167 = vmul.f32 %v1141, 0.00390625
    %v1168 = vmul.f32 %v1144, 0.00390625
    %v1169 = vmul.f32 %v1155, 0.00390625
    %v1170 = vmul.f32 %v1158, 0.00390625
    %v1171 = vmul.f32 %v1161, 0.00390625
    %v1172 = vmul.f32 %v1164, 0.00390625
    %v1173 = vmul.f32 %v1165, %v1165
    %v1174 = vmul.f32 %v1166, %v1166
    %v1175 = vmul.f32 %v1167, %v1167
    %v1176 = vmul.f32 %v1168, %v1168
    %v1177 = vsub.f32 %v1169, %v1173
    %v1178 = vsub.f32 %v1170, %v1174
    %v1179 = vsub.f32 %v1171, %v1175
    %v1180 = vsub.f32 %v1172, %v1176
    %v1181 = vmax.f32 %v1177, 0.0
    %v1182 = vmax.f32 %v1178, 0.0
    %v1183 = vmax.f32 %v1179, 0.0
    %v1184 = vmax.f32 %v1180, 0.0
    %s1185 = scalar_lea.vmem %s5, 96
    %v1186 = vld [vmem:[%s1185] sm:$0xff]
    %v1187 = vld [vmem:[%s1185 + $0x8] sm:$0xff]
    %v1188 = vld [vmem:[%s1185 + $0x10] sm:$0xff]
    %v1189 = vld [vmem:[%s1185 + $0x18] sm:$0xff]
    %v1190 = vadd.f32 %v1181, 1e-05
    %v1191 = vadd.f32 %v1182, 1e-05
    %v1192 = vadd.f32 %v1183, 1e-05
    %v1193 = vadd.f32 %v1184, 1e-05
    %v1194 = vrsqrt.pop %v1190
    %v1195 = vrsqrt.pop %v1191
    %v1196 = vrsqrt.pop %v1192
    %v1197 = vrsqrt.pop %v1193
    %v1198 = vmul.f32 %v1186, %v1194
    %v1199 = vmul.f32 %v1187, %v1195
    %v1200 = vmul.f32 %v1188, %v1196
    %v1201 = vmul.f32 %v1189, %v1197
    %s1202 = scalar_lea.vmem %s6, 96
    %v1203 = vld [vmem:[%s1202] sm:$0xff]
    %v1204 = vld [vmem:[%s1202 + $0x8] sm:$0xff]
    %v1205 = vld [vmem:[%s1202 + $0x10] sm:$0xff]
    %v1206 = vld [vmem:[%s1202 + $0x18] sm:$0xff]
    %v1207 = vmul.f32 %v1165, %v1198
    %v1208 = vmul.f32 %v1166, %v1199
    %v1209 = vmul.f32 %v1167, %v1200
    %v1210 = vmul.f32 %v1168, %v1201
    %v1211 = vsub.f32 %v1203, %v1207
    %v1212 = vsub.f32 %v1204, %v1208
    %v1213 = vsub.f32 %v1205, %v1209
    %v1214 = vsub.f32 %v1206, %v1210
    %1216 = vset.pattern.permute.xlu0 0
    %1217 = vperm.xlu0 %1216, %v1198
    %v1218 = vpop.permute.xlu0 %1217
    %1221 = vset.pattern.permute.xlu0 0
    %1222 = vperm.xlu0 %1221, %v1199
    %v1223 = vpop.permute.xlu0 %1222
    %1226 = vset.pattern.permute.xlu0 0
    %1227 = vperm.xlu0 %1226, %v1200
    %v1228 = vpop.permute.xlu0 %1227
    %1231 = vset.pattern.permute.xlu0 0
    %1232 = vperm.xlu0 %1231, %v1201
    %v1233 = vpop.permute.xlu0 %1232
    %v1235 = vmul.f32 %v1111, %v1218
    %v1236 = vmul.f32 %v1113, %v1218
    %v1237 = vmul.f32 %v1117, %v1223
    %v1238 = vmul.f32 %v1119, %v1223
    %v1239 = vmul.f32 %v1123, %v1228
    %v1240 = vmul.f32 %v1125, %v1228
    %v1241 = vmul.f32 %v1129, %v1233
    %v1242 = vmul.f32 %v1131, %v1233
    %1244 = vset.pattern.permute.xlu0 0
    %1245 = vperm.xlu0 %1244, %v1211
    %v1246 = vpop.permute.xlu0 %1245
    %1249 = vset.pattern.permute.xlu0 0
    %1250 = vperm.xlu0 %1249, %v1212
    %v1251 = vpop.permute.xlu0 %1250
    %1254 = vset.pattern.permute.xlu0 0
    %1255 = vperm.xlu0 %1254, %v1213
    %v1256 = vpop.permute.xlu0 %1255
    %1259 = vset.pattern.permute.xlu0 0
    %1260 = vperm.xlu0 %1259, %v1214
    %v1261 = vpop.permute.xlu0 %1260
    %v1263 = vadd.f32 %v1235, %v1246
    %v1264 = vadd.f32 %v1236, %v1246
    %v1265 = vadd.f32 %v1237, %v1251
    %v1266 = vadd.f32 %v1238, %v1251
    %v1267 = vadd.f32 %v1239, %v1256
    %v1268 = vadd.f32 %v1240, %v1256
    %v1269 = vadd.f32 %v1241, %v1261
    %v1270 = vadd.f32 %v1242, %v1261
    %v1271 = vmax.f32 %v1263, 0.0
    %v1272 = vmax.f32 %v1264, 0.0
    %v1273 = vmax.f32 %v1265, 0.0
    %v1274 = vmax.f32 %v1266, 0.0
    %v1275 = vmax.f32 %v1267, 0.0
    %v1276 = vmax.f32 %v1268, 0.0
    %v1277 = vmax.f32 %v1269, 0.0
    %v1278 = vmax.f32 %v1270, 0.0
    %s1279 = scalar_lea.vmem %s3, 128
    %v1280 = vld [vmem:[%s1279] sm:$0xff]
    %v1281 = vld [vmem:[%s1279 + $0x8] sm:$0xff]
    %v1282 = vld [vmem:[%s1279 + $0x10] sm:$0xff]
    %v1283 = vld [vmem:[%s1279 + $0x18] sm:$0xff]
    %s1284 = scalar_lea.vmem %s4, 128
    %v1285 = vld [vmem:[%s1284] sm:$0xff]
    %v1286 = vld [vmem:[%s1284 + $0x8] sm:$0xff]
    %v1287 = vld [vmem:[%s1284 + $0x10] sm:$0xff]
    %v1288 = vld [vmem:[%s1284 + $0x18] sm:$0xff]
    %1290 = vset.pattern.permute.xlu0 0
    %1291 = vperm.xlu0 %1290, %v1285
    %v1292 = vpop.permute.xlu0 %1291
    %1295 = vset.pattern.permute.xlu0 0
    %1296 = vperm.xlu0 %1295, %v1286
    %v1297 = vpop.permute.xlu0 %1296
    %1300 = vset.pattern.permute.xlu0 0
    %1301 = vperm.xlu0 %1300, %v1287
    %v1302 = vpop.permute.xlu0 %1301
    %1305 = vset.pattern.permute.xlu0 0
    %1306 = vperm.xlu0 %1305, %v1288
    %v1307 = vpop.permute.xlu0 %1306
    %v1310 = vsel %vm202, %v1280, 0
    %v1313 = vsel %vm202, %v1281, 0
    %v1316 = vsel %vm202, %v1282, 0
    %v1319 = vsel %vm202, %v1283, 0
    %1321 = vmatprep.subr.mxu0 %v1272
    %1322 = vmatpush1.msra.mxu0 %v1271
    %1323 = vmatprep.subr.mxu0 %v1274
    %1324 = vmatpush1.msra.mxu0 %v1273
    %1325 = vmatprep.subr.mxu0 %v1276
    %1326 = vmatpush1.msra.mxu0 %v1275
    %1327 = vmatprep.subr.mxu0 %v1278
    %1328 = vmatpush1.msra.mxu0 %v1277
    %1329 = vmatprep.subr.mxu0 0.0
    %1330 = vmatpush1.msra.mxu0 0.0
    %1331 = vmatprep.subr.mxu0 0.0
    %1332 = vmatpush1.msra.mxu0 0.0
    %1333 = vmatprep.subr.mxu0 0.0
    %1334 = vmatpush1.msra.mxu0 0.0
    %1335 = vmatprep.subr.mxu0 0.0
    %1336 = vmatpush1.msra.mxu0 0.0
    %1337 = vmatprep.subr.mxu0 0.0
    %1338 = vmatpush1.msra.mxu0 0.0
    %1339 = vmatprep.subr.mxu0 0.0
    %1340 = vmatpush1.msra.mxu0 0.0
    %1341 = vmatprep.subr.mxu0 0.0
    %1342 = vmatpush1.msra.mxu0 0.0
    %1343 = vmatprep.subr.mxu0 0.0
    %1344 = vmatpush1.msra.mxu0 0.0
    %1345 = vmatprep.subr.mxu0 0.0
    %1346 = vmatpush1.msra.mxu0 0.0
    %1347 = vmatprep.subr.mxu0 0.0
    %1348 = vmatpush1.msra.mxu0 0.0
    %1349 = vmatprep.subr.mxu0 0.0
    %1350 = vmatpush1.msra.mxu0 0.0
    %1351 = vmatprep.subr.mxu0 0.0
    %1352 = vmatpush1.msra.mxu0 0.0
    %1353 = vmatprep.subr.mxu0 0.0
    %1354 = vmatpush1.msra.mxu0 0.0
    %1355 = vmatprep.subr.mxu0 0.0
    %1356 = vmatpush1.msra.mxu0 0.0
    %1357 = vmatprep.subr.mxu0 0.0
    %1358 = vmatpush1.msra.mxu0 0.0
    %1359 = vmatprep.subr.mxu0 0.0
    %1360 = vmatpush1.msra.mxu0 0.0
    %1361 = vmatprep.subr.mxu0 0.0
    %1362 = vmatpush1.msra.mxu0 0.0
    %1363 = vmatprep.subr.mxu0 0.0
    %1364 = vmatpush1.msra.mxu0 0.0
    %1365 = vmatprep.subr.mxu0 0.0
    %1366 = vmatpush1.msra.mxu0 0.0
    %1367 = vmatprep.subr.mxu0 0.0
    %1368 = vmatpush1.msra.mxu0 0.0
    %1369 = vmatprep.subr.mxu0 0.0
    %1370 = vmatpush1.msra.mxu0 0.0
    %1371 = vmatprep.subr.mxu0 0.0
    %1372 = vmatpush1.msra.mxu0 0.0
    %1373 = vmatprep.subr.mxu0 0.0
    %1374 = vmatpush1.msra.mxu0 0.0
    %1375 = vmatprep.subr.mxu0 0.0
    %1376 = vmatpush1.msra.mxu0 0.0
    %1377 = vmatprep.subr.mxu0 0.0
    %1378 = vmatpush1.msra.mxu0 0.0
    %1379 = vmatprep.subr.mxu0 0.0
    %1380 = vmatpush1.msra.mxu0 0.0
    %1381 = vmatprep.subr.mxu0 0.0
    %1382 = vmatpush1.msra.mxu0 0.0
    %1383 = vmatprep.subr.mxu0 0.0
    %1384 = vmatpush1.msra.mxu0 0.0
    %1385 = vmatprep.mubr.f32.mxu0 0.0
    %1386 = vmatmul.mubr.f32.gmra.mrb[0].mxu0 %v1310
    %v1387 = vpop.f32.mrb[0].mxu0
    %v1388 = vadd.f32 %v1292, %v1387
    %v1389 = vpop.f32.mrb[0].mxu0
    %v1390 = vadd.f32 %v1292, %v1389
    %1391 = vmatprep.mubr.f32.mxu0 0.0
    %1392 = vmatmul.mubr.f32.gmra.mrb[0].mxu0 %v1313
    %v1393 = vpop.f32.mrb[0].mxu0
    %v1394 = vadd.f32 %v1297, %v1393
    %v1395 = vpop.f32.mrb[0].mxu0
    %v1396 = vadd.f32 %v1297, %v1395
    %1397 = vmatprep.mubr.f32.mxu0 0.0
    %1398 = vmatmul.mubr.f32.gmra.mrb[0].mxu0 %v1316
    %v1399 = vpop.f32.mrb[0].mxu0
    %v1400 = vadd.f32 %v1302, %v1399
    %v1401 = vpop.f32.mrb[0].mxu0
    %v1402 = vadd.f32 %v1302, %v1401
    %1403 = vmatprep.mubr.f32.mxu0 0.0
    %1404 = vmatmul.mubr.f32.gmra.mrb[0].mxu0 %v1319
    %v1405 = vpop.f32.mrb[0].mxu0
    %v1406 = vadd.f32 %v1307, %v1405
    %v1407 = vpop.f32.mrb[0].mxu0
    %v1408 = vadd.f32 %v1307, %v1407
    %1409 = vdwg.mxu0
    %v1410 = vadd.f32 %v1388, %v1390
    %1411 = vadd.xlane.f32.xlu0 %v1410
    %v1412 = vpop.xlane.xlu0 %1411
    %v1413 = vadd.f32 %v1394, %v1396
    %1414 = vadd.xlane.f32.xlu0 %v1413
    %v1415 = vpop.xlane.xlu0 %1414
    %v1416 = vadd.f32 %v1400, %v1402
    %1417 = vadd.xlane.f32.xlu0 %v1416
    %v1418 = vpop.xlane.xlu0 %1417
    %v1419 = vadd.f32 %v1406, %v1408
    %1420 = vadd.xlane.f32.xlu0 %v1419
    %v1421 = vpop.xlane.xlu0 %1420
    %v1422 = vmul.f32 %v1388, %v1388
    %v1423 = vmul.f32 %v1390, %v1390
    %v1424 = vmul.f32 %v1394, %v1394
    %v1425 = vmul.f32 %v1396, %v1396
    %v1426 = vmul.f32 %v1400, %v1400
    %v1427 = vmul.f32 %v1402, %v1402
    %v1428 = vmul.f32 %v1406, %v1406
    %v1429 = vmul.f32 %v1408, %v1408
    %v1430 = vadd.f32 %v1422, %v1423
    %1431 = vadd.xlane.f32.xlu0 %v1430
    %v1432 = vpop.xlane.xlu0 %1431
    %v1433 = vadd.f32 %v1424, %v1425
    %1434 = vadd.xlane.f32.xlu0 %v1433
    %v1435 = vpop.xlane.xlu0 %1434
    %v1436 = vadd.f32 %v1426, %v1427
    %1437 = vadd.xlane.f32.xlu0 %v1436
    %v1438 = vpop.xlane.xlu0 %1437
    %v1439 = vadd.f32 %v1428, %v1429
    %1440 = vadd.xlane.f32.xlu0 %v1439
    %v1441 = vpop.xlane.xlu0 %1440
    %v1442 = vmul.f32 %v1412, 0.00390625
    %v1443 = vmul.f32 %v1415, 0.00390625
    %v1444 = vmul.f32 %v1418, 0.00390625
    %v1445 = vmul.f32 %v1421, 0.00390625
    %v1446 = vmul.f32 %v1432, 0.00390625
    %v1447 = vmul.f32 %v1435, 0.00390625
    %v1448 = vmul.f32 %v1438, 0.00390625
    %v1449 = vmul.f32 %v1441, 0.00390625
    %v1450 = vmul.f32 %v1442, %v1442
    %v1451 = vmul.f32 %v1443, %v1443
    %v1452 = vmul.f32 %v1444, %v1444
    %v1453 = vmul.f32 %v1445, %v1445
    %v1454 = vsub.f32 %v1446, %v1450
    %v1455 = vsub.f32 %v1447, %v1451
    %v1456 = vsub.f32 %v1448, %v1452
    %v1457 = vsub.f32 %v1449, %v1453
    %v1458 = vmax.f32 %v1454, 0.0
    %v1459 = vmax.f32 %v1455, 0.0
    %v1460 = vmax.f32 %v1456, 0.0
    %v1461 = vmax.f32 %v1457, 0.0
    %s1462 = scalar_lea.vmem %s5, 128
    %v1463 = vld [vmem:[%s1462] sm:$0xff]
    %v1464 = vld [vmem:[%s1462 + $0x8] sm:$0xff]
    %v1465 = vld [vmem:[%s1462 + $0x10] sm:$0xff]
    %v1466 = vld [vmem:[%s1462 + $0x18] sm:$0xff]
    %v1467 = vadd.f32 %v1458, 1e-05
    %v1468 = vadd.f32 %v1459, 1e-05
    %v1469 = vadd.f32 %v1460, 1e-05
    %v1470 = vadd.f32 %v1461, 1e-05
    %v1471 = vrsqrt.pop %v1467
    %v1472 = vrsqrt.pop %v1468
    %v1473 = vrsqrt.pop %v1469
    %v1474 = vrsqrt.pop %v1470
    %v1475 = vmul.f32 %v1463, %v1471
    %v1476 = vmul.f32 %v1464, %v1472
    %v1477 = vmul.f32 %v1465, %v1473
    %v1478 = vmul.f32 %v1466, %v1474
    %s1479 = scalar_lea.vmem %s6, 128
    %v1480 = vld [vmem:[%s1479] sm:$0xff]
    %v1481 = vld [vmem:[%s1479 + $0x8] sm:$0xff]
    %v1482 = vld [vmem:[%s1479 + $0x10] sm:$0xff]
    %v1483 = vld [vmem:[%s1479 + $0x18] sm:$0xff]
    %v1484 = vmul.f32 %v1442, %v1475
    %v1485 = vmul.f32 %v1443, %v1476
    %v1486 = vmul.f32 %v1444, %v1477
    %v1487 = vmul.f32 %v1445, %v1478
    %v1488 = vsub.f32 %v1480, %v1484
    %v1489 = vsub.f32 %v1481, %v1485
    %v1490 = vsub.f32 %v1482, %v1486
    %v1491 = vsub.f32 %v1483, %v1487
    %1493 = vset.pattern.permute.xlu0 0
    %1494 = vperm.xlu0 %1493, %v1475
    %v1495 = vpop.permute.xlu0 %1494
    %1498 = vset.pattern.permute.xlu0 0
    %1499 = vperm.xlu0 %1498, %v1476
    %v1500 = vpop.permute.xlu0 %1499
    %1503 = vset.pattern.permute.xlu0 0
    %1504 = vperm.xlu0 %1503, %v1477
    %v1505 = vpop.permute.xlu0 %1504
    %1508 = vset.pattern.permute.xlu0 0
    %1509 = vperm.xlu0 %1508, %v1478
    %v1510 = vpop.permute.xlu0 %1509
    %v1512 = vmul.f32 %v1388, %v1495
    %v1513 = vmul.f32 %v1390, %v1495
    %v1514 = vmul.f32 %v1394, %v1500
    %v1515 = vmul.f32 %v1396, %v1500
    %v1516 = vmul.f32 %v1400, %v1505
    %v1517 = vmul.f32 %v1402, %v1505
    %v1518 = vmul.f32 %v1406, %v1510
    %v1519 = vmul.f32 %v1408, %v1510
    %1521 = vset.pattern.permute.xlu0 0
    %1522 = vperm.xlu0 %1521, %v1488
    %v1523 = vpop.permute.xlu0 %1522
    %1526 = vset.pattern.permute.xlu0 0
    %1527 = vperm.xlu0 %1526, %v1489
    %v1528 = vpop.permute.xlu0 %1527
    %1531 = vset.pattern.permute.xlu0 0
    %1532 = vperm.xlu0 %1531, %v1490
    %v1533 = vpop.permute.xlu0 %1532
    %1536 = vset.pattern.permute.xlu0 0
    %1537 = vperm.xlu0 %1536, %v1491
    %v1538 = vpop.permute.xlu0 %1537
    %v1540 = vadd.f32 %v1512, %v1523
    %v1541 = vadd.f32 %v1513, %v1523
    %v1542 = vadd.f32 %v1514, %v1528
    %v1543 = vadd.f32 %v1515, %v1528
    %v1544 = vadd.f32 %v1516, %v1533
    %v1545 = vadd.f32 %v1517, %v1533
    %v1546 = vadd.f32 %v1518, %v1538
    %v1547 = vadd.f32 %v1519, %v1538
    %v1548 = vmax.f32 %v1540, 0.0
    %v1549 = vmax.f32 %v1541, 0.0
    %v1550 = vmax.f32 %v1542, 0.0
    %v1551 = vmax.f32 %v1543, 0.0
    %v1552 = vmax.f32 %v1544, 0.0
    %v1553 = vmax.f32 %v1545, 0.0
    %v1554 = vmax.f32 %v1546, 0.0
    %v1555 = vmax.f32 %v1547, 0.0
    %s1556 = scalar_lea.vmem %s3, 160
    %v1557 = vld [vmem:[%s1556] sm:$0xff]
    %v1558 = vld [vmem:[%s1556 + $0x8] sm:$0xff]
    %v1559 = vld [vmem:[%s1556 + $0x10] sm:$0xff]
    %v1560 = vld [vmem:[%s1556 + $0x18] sm:$0xff]
    %s1561 = scalar_lea.vmem %s4, 160
    %v1562 = vld [vmem:[%s1561] sm:$0xff]
    %v1563 = vld [vmem:[%s1561 + $0x8] sm:$0xff]
    %v1564 = vld [vmem:[%s1561 + $0x10] sm:$0xff]
    %v1565 = vld [vmem:[%s1561 + $0x18] sm:$0xff]
    %1567 = vset.pattern.permute.xlu0 0
    %1568 = vperm.xlu0 %1567, %v1562
    %v1569 = vpop.permute.xlu0 %1568
    %1572 = vset.pattern.permute.xlu0 0
    %1573 = vperm.xlu0 %1572, %v1563
    %v1574 = vpop.permute.xlu0 %1573
    %1577 = vset.pattern.permute.xlu0 0
    %1578 = vperm.xlu0 %1577, %v1564
    %v1579 = vpop.permute.xlu0 %1578
    %1582 = vset.pattern.permute.xlu0 0
    %1583 = vperm.xlu0 %1582, %v1565
    %v1584 = vpop.permute.xlu0 %1583
    %v1587 = vsel %vm202, %v1557, 0
    %v1590 = vsel %vm202, %v1558, 0
    %v1593 = vsel %vm202, %v1559, 0
    %v1596 = vsel %vm202, %v1560, 0
    %1598 = vmatprep.subr.mxu0 %v1549
    %1599 = vmatpush1.msra.mxu0 %v1548
    %1600 = vmatprep.subr.mxu0 %v1551
    %1601 = vmatpush1.msra.mxu0 %v1550
    %1602 = vmatprep.subr.mxu0 %v1553
    %1603 = vmatpush1.msra.mxu0 %v1552
    %1604 = vmatprep.subr.mxu0 %v1555
    %1605 = vmatpush1.msra.mxu0 %v1554
    %1606 = vmatprep.subr.mxu0 0.0
    %1607 = vmatpush1.msra.mxu0 0.0
    %1608 = vmatprep.subr.mxu0 0.0
    %1609 = vmatpush1.msra.mxu0 0.0
    %1610 = vmatprep.subr.mxu0 0.0
    %1611 = vmatpush1.msra.mxu0 0.0
    %1612 = vmatprep.subr.mxu0 0.0
    %1613 = vmatpush1.msra.mxu0 0.0
    %1614 = vmatprep.subr.mxu0 0.0
    %1615 = vmatpush1.msra.mxu0 0.0
    %1616 = vmatprep.subr.mxu0 0.0
    %1617 = vmatpush1.msra.mxu0 0.0
    %1618 = vmatprep.subr.mxu0 0.0
    %1619 = vmatpush1.msra.mxu0 0.0
    %1620 = vmatprep.subr.mxu0 0.0
    %1621 = vmatpush1.msra.mxu0 0.0
    %1622 = vmatprep.subr.mxu0 0.0
    %1623 = vmatpush1.msra.mxu0 0.0
    %1624 = vmatprep.subr.mxu0 0.0
    %1625 = vmatpush1.msra.mxu0 0.0
    %1626 = vmatprep.subr.mxu0 0.0
    %1627 = vmatpush1.msra.mxu0 0.0
    %1628 = vmatprep.subr.mxu0 0.0
    %1629 = vmatpush1.msra.mxu0 0.0
    %1630 = vmatprep.subr.mxu0 0.0
    %1631 = vmatpush1.msra.mxu0 0.0
    %1632 = vmatprep.subr.mxu0 0.0
    %1633 = vmatpush1.msra.mxu0 0.0
    %1634 = vmatprep.subr.mxu0 0.0
    %1635 = vmatpush1.msra.mxu0 0.0
    %1636 = vmatprep.subr.mxu0 0.0
    %1637 = vmatpush1.msra.mxu0 0.0
    %1638 = vmatprep.subr.mxu0 0.0
    %1639 = vmatpush1.msra.mxu0 0.0
    %1640 = vmatprep.subr.mxu0 0.0
    %1641 = vmatpush1.msra.mxu0 0.0
    %1642 = vmatprep.subr.mxu0 0.0
    %1643 = vmatpush1.msra.mxu0 0.0
    %1644 = vmatprep.subr.mxu0 0.0
    %1645 = vmatpush1.msra.mxu0 0.0
    %1646 = vmatprep.subr.mxu0 0.0
    %1647 = vmatpush1.msra.mxu0 0.0
    %1648 = vmatprep.subr.mxu0 0.0
    %1649 = vmatpush1.msra.mxu0 0.0
    %1650 = vmatprep.subr.mxu0 0.0
    %1651 = vmatpush1.msra.mxu0 0.0
    %1652 = vmatprep.subr.mxu0 0.0
    %1653 = vmatpush1.msra.mxu0 0.0
    %1654 = vmatprep.subr.mxu0 0.0
    %1655 = vmatpush1.msra.mxu0 0.0
    %1656 = vmatprep.subr.mxu0 0.0
    %1657 = vmatpush1.msra.mxu0 0.0
    %1658 = vmatprep.subr.mxu0 0.0
    %1659 = vmatpush1.msra.mxu0 0.0
    %1660 = vmatprep.subr.mxu0 0.0
    %1661 = vmatpush1.msra.mxu0 0.0
    %1662 = vmatprep.mubr.f32.mxu0 0.0
    %1663 = vmatmul.mubr.f32.gmra.mrb[0].mxu0 %v1587
    %v1664 = vpop.f32.mrb[0].mxu0
    %v1665 = vadd.f32 %v1569, %v1664
    %v1666 = vpop.f32.mrb[0].mxu0
    %v1667 = vadd.f32 %v1569, %v1666
    %1668 = vmatprep.mubr.f32.mxu0 0.0
    %1669 = vmatmul.mubr.f32.gmra.mrb[0].mxu0 %v1590
    %v1670 = vpop.f32.mrb[0].mxu0
    %v1671 = vadd.f32 %v1574, %v1670
    %v1672 = vpop.f32.mrb[0].mxu0
    %v1673 = vadd.f32 %v1574, %v1672
    %1674 = vmatprep.mubr.f32.mxu0 0.0
    %1675 = vmatmul.mubr.f32.gmra.mrb[0].mxu0 %v1593
    %v1676 = vpop.f32.mrb[0].mxu0
    %v1677 = vadd.f32 %v1579, %v1676
    %v1678 = vpop.f32.mrb[0].mxu0
    %v1679 = vadd.f32 %v1579, %v1678
    %1680 = vmatprep.mubr.f32.mxu0 0.0
    %1681 = vmatmul.mubr.f32.gmra.mrb[0].mxu0 %v1596
    %v1682 = vpop.f32.mrb[0].mxu0
    %v1683 = vadd.f32 %v1584, %v1682
    %v1684 = vpop.f32.mrb[0].mxu0
    %v1685 = vadd.f32 %v1584, %v1684
    %1686 = vdwg.mxu0
    %v1687 = vadd.f32 %v1665, %v1667
    %1688 = vadd.xlane.f32.xlu0 %v1687
    %v1689 = vpop.xlane.xlu0 %1688
    %v1690 = vadd.f32 %v1671, %v1673
    %1691 = vadd.xlane.f32.xlu0 %v1690
    %v1692 = vpop.xlane.xlu0 %1691
    %v1693 = vadd.f32 %v1677, %v1679
    %1694 = vadd.xlane.f32.xlu0 %v1693
    %v1695 = vpop.xlane.xlu0 %1694
    %v1696 = vadd.f32 %v1683, %v1685
    %1697 = vadd.xlane.f32.xlu0 %v1696
    %v1698 = vpop.xlane.xlu0 %1697
    %v1699 = vmul.f32 %v1665, %v1665
    %v1700 = vmul.f32 %v1667, %v1667
    %v1701 = vmul.f32 %v1671, %v1671
    %v1702 = vmul.f32 %v1673, %v1673
    %v1703 = vmul.f32 %v1677, %v1677
    %v1704 = vmul.f32 %v1679, %v1679
    %v1705 = vmul.f32 %v1683, %v1683
    %v1706 = vmul.f32 %v1685, %v1685
    %v1707 = vadd.f32 %v1699, %v1700
    %1708 = vadd.xlane.f32.xlu0 %v1707
    %v1709 = vpop.xlane.xlu0 %1708
    %v1710 = vadd.f32 %v1701, %v1702
    %1711 = vadd.xlane.f32.xlu0 %v1710
    %v1712 = vpop.xlane.xlu0 %1711
    %v1713 = vadd.f32 %v1703, %v1704
    %1714 = vadd.xlane.f32.xlu0 %v1713
    %v1715 = vpop.xlane.xlu0 %1714
    %v1716 = vadd.f32 %v1705, %v1706
    %1717 = vadd.xlane.f32.xlu0 %v1716
    %v1718 = vpop.xlane.xlu0 %1717
    %v1719 = vmul.f32 %v1689, 0.00390625
    %v1720 = vmul.f32 %v1692, 0.00390625
    %v1721 = vmul.f32 %v1695, 0.00390625
    %v1722 = vmul.f32 %v1698, 0.00390625
    %v1723 = vmul.f32 %v1709, 0.00390625
    %v1724 = vmul.f32 %v1712, 0.00390625
    %v1725 = vmul.f32 %v1715, 0.00390625
    %v1726 = vmul.f32 %v1718, 0.00390625
    %v1727 = vmul.f32 %v1719, %v1719
    %v1728 = vmul.f32 %v1720, %v1720
    %v1729 = vmul.f32 %v1721, %v1721
    %v1730 = vmul.f32 %v1722, %v1722
    %v1731 = vsub.f32 %v1723, %v1727
    %v1732 = vsub.f32 %v1724, %v1728
    %v1733 = vsub.f32 %v1725, %v1729
    %v1734 = vsub.f32 %v1726, %v1730
    %v1735 = vmax.f32 %v1731, 0.0
    %v1736 = vmax.f32 %v1732, 0.0
    %v1737 = vmax.f32 %v1733, 0.0
    %v1738 = vmax.f32 %v1734, 0.0
    %s1739 = scalar_lea.vmem %s5, 160
    %v1740 = vld [vmem:[%s1739] sm:$0xff]
    %v1741 = vld [vmem:[%s1739 + $0x8] sm:$0xff]
    %v1742 = vld [vmem:[%s1739 + $0x10] sm:$0xff]
    %v1743 = vld [vmem:[%s1739 + $0x18] sm:$0xff]
    %v1744 = vadd.f32 %v1735, 1e-05
    %v1745 = vadd.f32 %v1736, 1e-05
    %v1746 = vadd.f32 %v1737, 1e-05
    %v1747 = vadd.f32 %v1738, 1e-05
    %v1748 = vrsqrt.pop %v1744
    %v1749 = vrsqrt.pop %v1745
    %v1750 = vrsqrt.pop %v1746
    %v1751 = vrsqrt.pop %v1747
    %v1752 = vmul.f32 %v1740, %v1748
    %v1753 = vmul.f32 %v1741, %v1749
    %v1754 = vmul.f32 %v1742, %v1750
    %v1755 = vmul.f32 %v1743, %v1751
    %s1756 = scalar_lea.vmem %s6, 160
    %v1757 = vld [vmem:[%s1756] sm:$0xff]
    %v1758 = vld [vmem:[%s1756 + $0x8] sm:$0xff]
    %v1759 = vld [vmem:[%s1756 + $0x10] sm:$0xff]
    %v1760 = vld [vmem:[%s1756 + $0x18] sm:$0xff]
    %v1761 = vmul.f32 %v1719, %v1752
    %v1762 = vmul.f32 %v1720, %v1753
    %v1763 = vmul.f32 %v1721, %v1754
    %v1764 = vmul.f32 %v1722, %v1755
    %v1765 = vsub.f32 %v1757, %v1761
    %v1766 = vsub.f32 %v1758, %v1762
    %v1767 = vsub.f32 %v1759, %v1763
    %v1768 = vsub.f32 %v1760, %v1764
    %1770 = vset.pattern.permute.xlu0 0
    %1771 = vperm.xlu0 %1770, %v1752
    %v1772 = vpop.permute.xlu0 %1771
    %1775 = vset.pattern.permute.xlu0 0
    %1776 = vperm.xlu0 %1775, %v1753
    %v1777 = vpop.permute.xlu0 %1776
    %1780 = vset.pattern.permute.xlu0 0
    %1781 = vperm.xlu0 %1780, %v1754
    %v1782 = vpop.permute.xlu0 %1781
    %1785 = vset.pattern.permute.xlu0 0
    %1786 = vperm.xlu0 %1785, %v1755
    %v1787 = vpop.permute.xlu0 %1786
    %v1789 = vmul.f32 %v1665, %v1772
    %v1790 = vmul.f32 %v1667, %v1772
    %v1791 = vmul.f32 %v1671, %v1777
    %v1792 = vmul.f32 %v1673, %v1777
    %v1793 = vmul.f32 %v1677, %v1782
    %v1794 = vmul.f32 %v1679, %v1782
    %v1795 = vmul.f32 %v1683, %v1787
    %v1796 = vmul.f32 %v1685, %v1787
    %1798 = vset.pattern.permute.xlu0 0
    %1799 = vperm.xlu0 %1798, %v1765
    %v1800 = vpop.permute.xlu0 %1799
    %1803 = vset.pattern.permute.xlu0 0
    %1804 = vperm.xlu0 %1803, %v1766
    %v1805 = vpop.permute.xlu0 %1804
    %1808 = vset.pattern.permute.xlu0 0
    %1809 = vperm.xlu0 %1808, %v1767
    %v1810 = vpop.permute.xlu0 %1809
    %1813 = vset.pattern.permute.xlu0 0
    %1814 = vperm.xlu0 %1813, %v1768
    %v1815 = vpop.permute.xlu0 %1814
    %v1817 = vadd.f32 %v1789, %v1800
    %v1818 = vadd.f32 %v1790, %v1800
    %v1819 = vadd.f32 %v1791, %v1805
    %v1820 = vadd.f32 %v1792, %v1805
    %v1821 = vadd.f32 %v1793, %v1810
    %v1822 = vadd.f32 %v1794, %v1810
    %v1823 = vadd.f32 %v1795, %v1815
    %v1824 = vadd.f32 %v1796, %v1815
    %v1825 = vmax.f32 %v1817, 0.0
    %v1826 = vmax.f32 %v1818, 0.0
    %v1827 = vmax.f32 %v1819, 0.0
    %v1828 = vmax.f32 %v1820, 0.0
    %v1829 = vmax.f32 %v1821, 0.0
    %v1830 = vmax.f32 %v1822, 0.0
    %v1831 = vmax.f32 %v1823, 0.0
    %v1832 = vmax.f32 %v1824, 0.0
    %s1833 = scalar_lea.vmem %s3, 192
    %v1834 = vld [vmem:[%s1833] sm:$0xff]
    %v1835 = vld [vmem:[%s1833 + $0x8] sm:$0xff]
    %v1836 = vld [vmem:[%s1833 + $0x10] sm:$0xff]
    %v1837 = vld [vmem:[%s1833 + $0x18] sm:$0xff]
    %s1838 = scalar_lea.vmem %s4, 192
    %v1839 = vld [vmem:[%s1838] sm:$0xff]
    %v1840 = vld [vmem:[%s1838 + $0x8] sm:$0xff]
    %v1841 = vld [vmem:[%s1838 + $0x10] sm:$0xff]
    %v1842 = vld [vmem:[%s1838 + $0x18] sm:$0xff]
    %1844 = vset.pattern.permute.xlu0 0
    %1845 = vperm.xlu0 %1844, %v1839
    %v1846 = vpop.permute.xlu0 %1845
    %1849 = vset.pattern.permute.xlu0 0
    %1850 = vperm.xlu0 %1849, %v1840
    %v1851 = vpop.permute.xlu0 %1850
    %1854 = vset.pattern.permute.xlu0 0
    %1855 = vperm.xlu0 %1854, %v1841
    %v1856 = vpop.permute.xlu0 %1855
    %1859 = vset.pattern.permute.xlu0 0
    %1860 = vperm.xlu0 %1859, %v1842
    %v1861 = vpop.permute.xlu0 %1860
    %v1864 = vsel %vm202, %v1834, 0
    %v1867 = vsel %vm202, %v1835, 0
    %v1870 = vsel %vm202, %v1836, 0
    %v1873 = vsel %vm202, %v1837, 0
    %1875 = vmatprep.subr.mxu0 %v1826
    %1876 = vmatpush1.msra.mxu0 %v1825
    %1877 = vmatprep.subr.mxu0 %v1828
    %1878 = vmatpush1.msra.mxu0 %v1827
    %1879 = vmatprep.subr.mxu0 %v1830
    %1880 = vmatpush1.msra.mxu0 %v1829
    %1881 = vmatprep.subr.mxu0 %v1832
    %1882 = vmatpush1.msra.mxu0 %v1831
    %1883 = vmatprep.subr.mxu0 0.0
    %1884 = vmatpush1.msra.mxu0 0.0
    %1885 = vmatprep.subr.mxu0 0.0
    %1886 = vmatpush1.msra.mxu0 0.0
    %1887 = vmatprep.subr.mxu0 0.0
    %1888 = vmatpush1.msra.mxu0 0.0
    %1889 = vmatprep.subr.mxu0 0.0
    %1890 = vmatpush1.msra.mxu0 0.0
    %1891 = vmatprep.subr.mxu0 0.0
    %1892 = vmatpush1.msra.mxu0 0.0
    %1893 = vmatprep.subr.mxu0 0.0
    %1894 = vmatpush1.msra.mxu0 0.0
    %1895 = vmatprep.subr.mxu0 0.0
    %1896 = vmatpush1.msra.mxu0 0.0
    %1897 = vmatprep.subr.mxu0 0.0
    %1898 = vmatpush1.msra.mxu0 0.0
    %1899 = vmatprep.subr.mxu0 0.0
    %1900 = vmatpush1.msra.mxu0 0.0
    %1901 = vmatprep.subr.mxu0 0.0
    %1902 = vmatpush1.msra.mxu0 0.0
    %1903 = vmatprep.subr.mxu0 0.0
    %1904 = vmatpush1.msra.mxu0 0.0
    %1905 = vmatprep.subr.mxu0 0.0
    %1906 = vmatpush1.msra.mxu0 0.0
    %1907 = vmatprep.subr.mxu0 0.0
    %1908 = vmatpush1.msra.mxu0 0.0
    %1909 = vmatprep.subr.mxu0 0.0
    %1910 = vmatpush1.msra.mxu0 0.0
    %1911 = vmatprep.subr.mxu0 0.0
    %1912 = vmatpush1.msra.mxu0 0.0
    %1913 = vmatprep.subr.mxu0 0.0
    %1914 = vmatpush1.msra.mxu0 0.0
    %1915 = vmatprep.subr.mxu0 0.0
    %1916 = vmatpush1.msra.mxu0 0.0
    %1917 = vmatprep.subr.mxu0 0.0
    %1918 = vmatpush1.msra.mxu0 0.0
    %1919 = vmatprep.subr.mxu0 0.0
    %1920 = vmatpush1.msra.mxu0 0.0
    %1921 = vmatprep.subr.mxu0 0.0
    %1922 = vmatpush1.msra.mxu0 0.0
    %1923 = vmatprep.subr.mxu0 0.0
    %1924 = vmatpush1.msra.mxu0 0.0
    %1925 = vmatprep.subr.mxu0 0.0
    %1926 = vmatpush1.msra.mxu0 0.0
    %1927 = vmatprep.subr.mxu0 0.0
    %1928 = vmatpush1.msra.mxu0 0.0
    %1929 = vmatprep.subr.mxu0 0.0
    %1930 = vmatpush1.msra.mxu0 0.0
    %1931 = vmatprep.subr.mxu0 0.0
    %1932 = vmatpush1.msra.mxu0 0.0
    %1933 = vmatprep.subr.mxu0 0.0
    %1934 = vmatpush1.msra.mxu0 0.0
    %1935 = vmatprep.subr.mxu0 0.0
    %1936 = vmatpush1.msra.mxu0 0.0
    %1937 = vmatprep.subr.mxu0 0.0
    %1938 = vmatpush1.msra.mxu0 0.0
    %1939 = vmatprep.mubr.f32.mxu0 0.0
    %1940 = vmatmul.mubr.f32.gmra.mrb[0].mxu0 %v1864
    %v1941 = vpop.f32.mrb[0].mxu0
    %v1942 = vadd.f32 %v1846, %v1941
    %v1943 = vpop.f32.mrb[0].mxu0
    %v1944 = vadd.f32 %v1846, %v1943
    %1945 = vmatprep.mubr.f32.mxu0 0.0
    %1946 = vmatmul.mubr.f32.gmra.mrb[0].mxu0 %v1867
    %v1947 = vpop.f32.mrb[0].mxu0
    %v1948 = vadd.f32 %v1851, %v1947
    %v1949 = vpop.f32.mrb[0].mxu0
    %v1950 = vadd.f32 %v1851, %v1949
    %1951 = vmatprep.mubr.f32.mxu0 0.0
    %1952 = vmatmul.mubr.f32.gmra.mrb[0].mxu0 %v1870
    %v1953 = vpop.f32.mrb[0].mxu0
    %v1954 = vadd.f32 %v1856, %v1953
    %v1955 = vpop.f32.mrb[0].mxu0
    %v1956 = vadd.f32 %v1856, %v1955
    %1957 = vmatprep.mubr.f32.mxu0 0.0
    %1958 = vmatmul.mubr.f32.gmra.mrb[0].mxu0 %v1873
    %v1959 = vpop.f32.mrb[0].mxu0
    %v1960 = vadd.f32 %v1861, %v1959
    %v1961 = vpop.f32.mrb[0].mxu0
    %v1962 = vadd.f32 %v1861, %v1961
    %1963 = vdwg.mxu0
    %v1964 = vadd.f32 %v1942, %v1944
    %1965 = vadd.xlane.f32.xlu0 %v1964
    %v1966 = vpop.xlane.xlu0 %1965
    %v1967 = vadd.f32 %v1948, %v1950
    %1968 = vadd.xlane.f32.xlu0 %v1967
    %v1969 = vpop.xlane.xlu0 %1968
    %v1970 = vadd.f32 %v1954, %v1956
    %1971 = vadd.xlane.f32.xlu0 %v1970
    %v1972 = vpop.xlane.xlu0 %1971
    %v1973 = vadd.f32 %v1960, %v1962
    %1974 = vadd.xlane.f32.xlu0 %v1973
    %v1975 = vpop.xlane.xlu0 %1974
    %v1976 = vmul.f32 %v1942, %v1942
    %v1977 = vmul.f32 %v1944, %v1944
    %v1978 = vmul.f32 %v1948, %v1948
    %v1979 = vmul.f32 %v1950, %v1950
    %v1980 = vmul.f32 %v1954, %v1954
    %v1981 = vmul.f32 %v1956, %v1956
    %v1982 = vmul.f32 %v1960, %v1960
    %v1983 = vmul.f32 %v1962, %v1962
    %v1984 = vadd.f32 %v1976, %v1977
    %1985 = vadd.xlane.f32.xlu0 %v1984
    %v1986 = vpop.xlane.xlu0 %1985
    %v1987 = vadd.f32 %v1978, %v1979
    %1988 = vadd.xlane.f32.xlu0 %v1987
    %v1989 = vpop.xlane.xlu0 %1988
    %v1990 = vadd.f32 %v1980, %v1981
    %1991 = vadd.xlane.f32.xlu0 %v1990
    %v1992 = vpop.xlane.xlu0 %1991
    %v1993 = vadd.f32 %v1982, %v1983
    %1994 = vadd.xlane.f32.xlu0 %v1993
    %v1995 = vpop.xlane.xlu0 %1994
    %v1996 = vmul.f32 %v1966, 0.00390625
    %v1997 = vmul.f32 %v1969, 0.00390625
    %v1998 = vmul.f32 %v1972, 0.00390625
    %v1999 = vmul.f32 %v1975, 0.00390625
    %v2000 = vmul.f32 %v1986, 0.00390625
    %v2001 = vmul.f32 %v1989, 0.00390625
    %v2002 = vmul.f32 %v1992, 0.00390625
    %v2003 = vmul.f32 %v1995, 0.00390625
    %v2004 = vmul.f32 %v1996, %v1996
    %v2005 = vmul.f32 %v1997, %v1997
    %v2006 = vmul.f32 %v1998, %v1998
    %v2007 = vmul.f32 %v1999, %v1999
    %v2008 = vsub.f32 %v2000, %v2004
    %v2009 = vsub.f32 %v2001, %v2005
    %v2010 = vsub.f32 %v2002, %v2006
    %v2011 = vsub.f32 %v2003, %v2007
    %v2012 = vmax.f32 %v2008, 0.0
    %v2013 = vmax.f32 %v2009, 0.0
    %v2014 = vmax.f32 %v2010, 0.0
    %v2015 = vmax.f32 %v2011, 0.0
    %s2016 = scalar_lea.vmem %s5, 192
    %v2017 = vld [vmem:[%s2016] sm:$0xff]
    %v2018 = vld [vmem:[%s2016 + $0x8] sm:$0xff]
    %v2019 = vld [vmem:[%s2016 + $0x10] sm:$0xff]
    %v2020 = vld [vmem:[%s2016 + $0x18] sm:$0xff]
    %v2021 = vadd.f32 %v2012, 1e-05
    %v2022 = vadd.f32 %v2013, 1e-05
    %v2023 = vadd.f32 %v2014, 1e-05
    %v2024 = vadd.f32 %v2015, 1e-05
    %v2025 = vrsqrt.pop %v2021
    %v2026 = vrsqrt.pop %v2022
    %v2027 = vrsqrt.pop %v2023
    %v2028 = vrsqrt.pop %v2024
    %v2029 = vmul.f32 %v2017, %v2025
    %v2030 = vmul.f32 %v2018, %v2026
    %v2031 = vmul.f32 %v2019, %v2027
    %v2032 = vmul.f32 %v2020, %v2028
    %s2033 = scalar_lea.vmem %s6, 192
    %v2034 = vld [vmem:[%s2033] sm:$0xff]
    %v2035 = vld [vmem:[%s2033 + $0x8] sm:$0xff]
    %v2036 = vld [vmem:[%s2033 + $0x10] sm:$0xff]
    %v2037 = vld [vmem:[%s2033 + $0x18] sm:$0xff]
    %v2038 = vmul.f32 %v1996, %v2029
    %v2039 = vmul.f32 %v1997, %v2030
    %v2040 = vmul.f32 %v1998, %v2031
    %v2041 = vmul.f32 %v1999, %v2032
    %v2042 = vsub.f32 %v2034, %v2038
    %v2043 = vsub.f32 %v2035, %v2039
    %v2044 = vsub.f32 %v2036, %v2040
    %v2045 = vsub.f32 %v2037, %v2041
    %2047 = vset.pattern.permute.xlu0 0
    %2048 = vperm.xlu0 %2047, %v2029
    %v2049 = vpop.permute.xlu0 %2048
    %2052 = vset.pattern.permute.xlu0 0
    %2053 = vperm.xlu0 %2052, %v2030
    %v2054 = vpop.permute.xlu0 %2053
    %2057 = vset.pattern.permute.xlu0 0
    %2058 = vperm.xlu0 %2057, %v2031
    %v2059 = vpop.permute.xlu0 %2058
    %2062 = vset.pattern.permute.xlu0 0
    %2063 = vperm.xlu0 %2062, %v2032
    %v2064 = vpop.permute.xlu0 %2063
    %v2066 = vmul.f32 %v1942, %v2049
    %v2067 = vmul.f32 %v1944, %v2049
    %v2068 = vmul.f32 %v1948, %v2054
    %v2069 = vmul.f32 %v1950, %v2054
    %v2070 = vmul.f32 %v1954, %v2059
    %v2071 = vmul.f32 %v1956, %v2059
    %v2072 = vmul.f32 %v1960, %v2064
    %v2073 = vmul.f32 %v1962, %v2064
    %2075 = vset.pattern.permute.xlu0 0
    %2076 = vperm.xlu0 %2075, %v2042
    %v2077 = vpop.permute.xlu0 %2076
    %2080 = vset.pattern.permute.xlu0 0
    %2081 = vperm.xlu0 %2080, %v2043
    %v2082 = vpop.permute.xlu0 %2081
    %2085 = vset.pattern.permute.xlu0 0
    %2086 = vperm.xlu0 %2085, %v2044
    %v2087 = vpop.permute.xlu0 %2086
    %2090 = vset.pattern.permute.xlu0 0
    %2091 = vperm.xlu0 %2090, %v2045
    %v2092 = vpop.permute.xlu0 %2091
    %v2094 = vadd.f32 %v2066, %v2077
    %v2095 = vadd.f32 %v2067, %v2077
    %v2096 = vadd.f32 %v2068, %v2082
    %v2097 = vadd.f32 %v2069, %v2082
    %v2098 = vadd.f32 %v2070, %v2087
    %v2099 = vadd.f32 %v2071, %v2087
    %v2100 = vadd.f32 %v2072, %v2092
    %v2101 = vadd.f32 %v2073, %v2092
    %v2102 = vmax.f32 %v2094, 0.0
    %v2103 = vmax.f32 %v2095, 0.0
    %v2104 = vmax.f32 %v2096, 0.0
    %v2105 = vmax.f32 %v2097, 0.0
    %v2106 = vmax.f32 %v2098, 0.0
    %v2107 = vmax.f32 %v2099, 0.0
    %v2108 = vmax.f32 %v2100, 0.0
    %v2109 = vmax.f32 %v2101, 0.0
    %s2110 = scalar_lea.vmem %s3, 224
    %v2111 = vld [vmem:[%s2110] sm:$0xff]
    %v2112 = vld [vmem:[%s2110 + $0x8] sm:$0xff]
    %v2113 = vld [vmem:[%s2110 + $0x10] sm:$0xff]
    %v2114 = vld [vmem:[%s2110 + $0x18] sm:$0xff]
    %s2115 = scalar_lea.vmem %s4, 224
    %v2116 = vld [vmem:[%s2115] sm:$0xff]
    %v2117 = vld [vmem:[%s2115 + $0x8] sm:$0xff]
    %v2118 = vld [vmem:[%s2115 + $0x10] sm:$0xff]
    %v2119 = vld [vmem:[%s2115 + $0x18] sm:$0xff]
    %2121 = vset.pattern.permute.xlu0 0
    %2122 = vperm.xlu0 %2121, %v2116
    %v2123 = vpop.permute.xlu0 %2122
    %2126 = vset.pattern.permute.xlu0 0
    %2127 = vperm.xlu0 %2126, %v2117
    %v2128 = vpop.permute.xlu0 %2127
    %2131 = vset.pattern.permute.xlu0 0
    %2132 = vperm.xlu0 %2131, %v2118
    %v2133 = vpop.permute.xlu0 %2132
    %2136 = vset.pattern.permute.xlu0 0
    %2137 = vperm.xlu0 %2136, %v2119
    %v2138 = vpop.permute.xlu0 %2137
    %v2141 = vsel %vm202, %v2111, 0
    %v2144 = vsel %vm202, %v2112, 0
    %v2147 = vsel %vm202, %v2113, 0
    %v2150 = vsel %vm202, %v2114, 0
    %2152 = vmatprep.subr.mxu0 %v2103
    %2153 = vmatpush1.msra.mxu0 %v2102
    %2154 = vmatprep.subr.mxu0 %v2105
    %2155 = vmatpush1.msra.mxu0 %v2104
    %2156 = vmatprep.subr.mxu0 %v2107
    %2157 = vmatpush1.msra.mxu0 %v2106
    %2158 = vmatprep.subr.mxu0 %v2109
    %2159 = vmatpush1.msra.mxu0 %v2108
    %2160 = vmatprep.subr.mxu0 0.0
    %2161 = vmatpush1.msra.mxu0 0.0
    %2162 = vmatprep.subr.mxu0 0.0
    %2163 = vmatpush1.msra.mxu0 0.0
    %2164 = vmatprep.subr.mxu0 0.0
    %2165 = vmatpush1.msra.mxu0 0.0
    %2166 = vmatprep.subr.mxu0 0.0
    %2167 = vmatpush1.msra.mxu0 0.0
    %2168 = vmatprep.subr.mxu0 0.0
    %2169 = vmatpush1.msra.mxu0 0.0
    %2170 = vmatprep.subr.mxu0 0.0
    %2171 = vmatpush1.msra.mxu0 0.0
    %2172 = vmatprep.subr.mxu0 0.0
    %2173 = vmatpush1.msra.mxu0 0.0
    %2174 = vmatprep.subr.mxu0 0.0
    %2175 = vmatpush1.msra.mxu0 0.0
    %2176 = vmatprep.subr.mxu0 0.0
    %2177 = vmatpush1.msra.mxu0 0.0
    %2178 = vmatprep.subr.mxu0 0.0
    %2179 = vmatpush1.msra.mxu0 0.0
    %2180 = vmatprep.subr.mxu0 0.0
    %2181 = vmatpush1.msra.mxu0 0.0
    %2182 = vmatprep.subr.mxu0 0.0
    %2183 = vmatpush1.msra.mxu0 0.0
    %2184 = vmatprep.subr.mxu0 0.0
    %2185 = vmatpush1.msra.mxu0 0.0
    %2186 = vmatprep.subr.mxu0 0.0
    %2187 = vmatpush1.msra.mxu0 0.0
    %2188 = vmatprep.subr.mxu0 0.0
    %2189 = vmatpush1.msra.mxu0 0.0
    %2190 = vmatprep.subr.mxu0 0.0
    %2191 = vmatpush1.msra.mxu0 0.0
    %2192 = vmatprep.subr.mxu0 0.0
    %2193 = vmatpush1.msra.mxu0 0.0
    %2194 = vmatprep.subr.mxu0 0.0
    %2195 = vmatpush1.msra.mxu0 0.0
    %2196 = vmatprep.subr.mxu0 0.0
    %2197 = vmatpush1.msra.mxu0 0.0
    %2198 = vmatprep.subr.mxu0 0.0
    %2199 = vmatpush1.msra.mxu0 0.0
    %2200 = vmatprep.subr.mxu0 0.0
    %2201 = vmatpush1.msra.mxu0 0.0
    %2202 = vmatprep.subr.mxu0 0.0
    %2203 = vmatpush1.msra.mxu0 0.0
    %2204 = vmatprep.subr.mxu0 0.0
    %2205 = vmatpush1.msra.mxu0 0.0
    %2206 = vmatprep.subr.mxu0 0.0
    %2207 = vmatpush1.msra.mxu0 0.0
    %2208 = vmatprep.subr.mxu0 0.0
    %2209 = vmatpush1.msra.mxu0 0.0
    %2210 = vmatprep.subr.mxu0 0.0
    %2211 = vmatpush1.msra.mxu0 0.0
    %2212 = vmatprep.subr.mxu0 0.0
    %2213 = vmatpush1.msra.mxu0 0.0
    %2214 = vmatprep.subr.mxu0 0.0
    %2215 = vmatpush1.msra.mxu0 0.0
    %2216 = vmatprep.mubr.f32.mxu0 0.0
    %2217 = vmatmul.mubr.f32.gmra.mrb[0].mxu0 %v2141
    %v2218 = vpop.f32.mrb[0].mxu0
    %v2219 = vadd.f32 %v2123, %v2218
    %v2220 = vpop.f32.mrb[0].mxu0
    %v2221 = vadd.f32 %v2123, %v2220
    %2222 = vmatprep.mubr.f32.mxu0 0.0
    %2223 = vmatmul.mubr.f32.gmra.mrb[0].mxu0 %v2144
    %v2224 = vpop.f32.mrb[0].mxu0
    %v2225 = vadd.f32 %v2128, %v2224
    %v2226 = vpop.f32.mrb[0].mxu0
    %v2227 = vadd.f32 %v2128, %v2226
    %2228 = vmatprep.mubr.f32.mxu0 0.0
    %2229 = vmatmul.mubr.f32.gmra.mrb[0].mxu0 %v2147
    %v2230 = vpop.f32.mrb[0].mxu0
    %v2231 = vadd.f32 %v2133, %v2230
    %v2232 = vpop.f32.mrb[0].mxu0
    %v2233 = vadd.f32 %v2133, %v2232
    %2234 = vmatprep.mubr.f32.mxu0 0.0
    %2235 = vmatmul.mubr.f32.gmra.mrb[0].mxu0 %v2150
    %v2236 = vpop.f32.mrb[0].mxu0
    %v2237 = vadd.f32 %v2138, %v2236
    %v2238 = vpop.f32.mrb[0].mxu0
    %v2239 = vadd.f32 %v2138, %v2238
    %2240 = vdwg.mxu0
    %v2241 = vadd.f32 %v2219, %v2221
    %2242 = vadd.xlane.f32.xlu0 %v2241
    %v2243 = vpop.xlane.xlu0 %2242
    %v2244 = vadd.f32 %v2225, %v2227
    %2245 = vadd.xlane.f32.xlu0 %v2244
    %v2246 = vpop.xlane.xlu0 %2245
    %v2247 = vadd.f32 %v2231, %v2233
    %2248 = vadd.xlane.f32.xlu0 %v2247
    %v2249 = vpop.xlane.xlu0 %2248
    %v2250 = vadd.f32 %v2237, %v2239
    %2251 = vadd.xlane.f32.xlu0 %v2250
    %v2252 = vpop.xlane.xlu0 %2251
    %v2253 = vmul.f32 %v2219, %v2219
    %v2254 = vmul.f32 %v2221, %v2221
    %v2255 = vmul.f32 %v2225, %v2225
    %v2256 = vmul.f32 %v2227, %v2227
    %v2257 = vmul.f32 %v2231, %v2231
    %v2258 = vmul.f32 %v2233, %v2233
    %v2259 = vmul.f32 %v2237, %v2237
    %v2260 = vmul.f32 %v2239, %v2239
    %v2261 = vadd.f32 %v2253, %v2254
    %2262 = vadd.xlane.f32.xlu0 %v2261
    %v2263 = vpop.xlane.xlu0 %2262
    %v2264 = vadd.f32 %v2255, %v2256
    %2265 = vadd.xlane.f32.xlu0 %v2264
    %v2266 = vpop.xlane.xlu0 %2265
    %v2267 = vadd.f32 %v2257, %v2258
    %2268 = vadd.xlane.f32.xlu0 %v2267
    %v2269 = vpop.xlane.xlu0 %2268
    %v2270 = vadd.f32 %v2259, %v2260
    %2271 = vadd.xlane.f32.xlu0 %v2270
    %v2272 = vpop.xlane.xlu0 %2271
    %v2273 = vmul.f32 %v2243, 0.00390625
    %v2274 = vmul.f32 %v2246, 0.00390625
    %v2275 = vmul.f32 %v2249, 0.00390625
    %v2276 = vmul.f32 %v2252, 0.00390625
    %v2277 = vmul.f32 %v2263, 0.00390625
    %v2278 = vmul.f32 %v2266, 0.00390625
    %v2279 = vmul.f32 %v2269, 0.00390625
    %v2280 = vmul.f32 %v2272, 0.00390625
    %v2281 = vmul.f32 %v2273, %v2273
    %v2282 = vmul.f32 %v2274, %v2274
    %v2283 = vmul.f32 %v2275, %v2275
    %v2284 = vmul.f32 %v2276, %v2276
    %v2285 = vsub.f32 %v2277, %v2281
    %v2286 = vsub.f32 %v2278, %v2282
    %v2287 = vsub.f32 %v2279, %v2283
    %v2288 = vsub.f32 %v2280, %v2284
    %v2289 = vmax.f32 %v2285, 0.0
    %v2290 = vmax.f32 %v2286, 0.0
    %v2291 = vmax.f32 %v2287, 0.0
    %v2292 = vmax.f32 %v2288, 0.0
    %s2293 = scalar_lea.vmem %s5, 224
    %v2294 = vld [vmem:[%s2293] sm:$0xff]
    %v2295 = vld [vmem:[%s2293 + $0x8] sm:$0xff]
    %v2296 = vld [vmem:[%s2293 + $0x10] sm:$0xff]
    %v2297 = vld [vmem:[%s2293 + $0x18] sm:$0xff]
    %v2298 = vadd.f32 %v2289, 1e-05
    %v2299 = vadd.f32 %v2290, 1e-05
    %v2300 = vadd.f32 %v2291, 1e-05
    %v2301 = vadd.f32 %v2292, 1e-05
    %v2302 = vrsqrt.pop %v2298
    %v2303 = vrsqrt.pop %v2299
    %v2304 = vrsqrt.pop %v2300
    %v2305 = vrsqrt.pop %v2301
    %v2306 = vmul.f32 %v2294, %v2302
    %v2307 = vmul.f32 %v2295, %v2303
    %v2308 = vmul.f32 %v2296, %v2304
    %v2309 = vmul.f32 %v2297, %v2305
    %s2310 = scalar_lea.vmem %s6, 224
    %v2311 = vld [vmem:[%s2310] sm:$0xff]
    %v2312 = vld [vmem:[%s2310 + $0x8] sm:$0xff]
    %v2313 = vld [vmem:[%s2310 + $0x10] sm:$0xff]
    %v2314 = vld [vmem:[%s2310 + $0x18] sm:$0xff]
    %v2315 = vmul.f32 %v2273, %v2306
    %v2316 = vmul.f32 %v2274, %v2307
    %v2317 = vmul.f32 %v2275, %v2308
    %v2318 = vmul.f32 %v2276, %v2309
    %v2319 = vsub.f32 %v2311, %v2315
    %v2320 = vsub.f32 %v2312, %v2316
    %v2321 = vsub.f32 %v2313, %v2317
    %v2322 = vsub.f32 %v2314, %v2318
    %2324 = vset.pattern.permute.xlu0 0
    %2325 = vperm.xlu0 %2324, %v2306
    %v2326 = vpop.permute.xlu0 %2325
    %2329 = vset.pattern.permute.xlu0 0
    %2330 = vperm.xlu0 %2329, %v2307
    %v2331 = vpop.permute.xlu0 %2330
    %2334 = vset.pattern.permute.xlu0 0
    %2335 = vperm.xlu0 %2334, %v2308
    %v2336 = vpop.permute.xlu0 %2335
    %2339 = vset.pattern.permute.xlu0 0
    %2340 = vperm.xlu0 %2339, %v2309
    %v2341 = vpop.permute.xlu0 %2340
    %v2343 = vmul.f32 %v2219, %v2326
    %v2344 = vmul.f32 %v2221, %v2326
    %v2345 = vmul.f32 %v2225, %v2331
    %v2346 = vmul.f32 %v2227, %v2331
    %v2347 = vmul.f32 %v2231, %v2336
    %v2348 = vmul.f32 %v2233, %v2336
    %v2349 = vmul.f32 %v2237, %v2341
    %v2350 = vmul.f32 %v2239, %v2341
    %2352 = vset.pattern.permute.xlu0 0
    %2353 = vperm.xlu0 %2352, %v2319
    %v2354 = vpop.permute.xlu0 %2353
    %2357 = vset.pattern.permute.xlu0 0
    %2358 = vperm.xlu0 %2357, %v2320
    %v2359 = vpop.permute.xlu0 %2358
    %2362 = vset.pattern.permute.xlu0 0
    %2363 = vperm.xlu0 %2362, %v2321
    %v2364 = vpop.permute.xlu0 %2363
    %2367 = vset.pattern.permute.xlu0 0
    %2368 = vperm.xlu0 %2367, %v2322
    %v2369 = vpop.permute.xlu0 %2368
    %v2371 = vadd.f32 %v2343, %v2354
    %v2372 = vadd.f32 %v2344, %v2354
    %v2373 = vadd.f32 %v2345, %v2359
    %v2374 = vadd.f32 %v2346, %v2359
    %v2375 = vadd.f32 %v2347, %v2364
    %v2376 = vadd.f32 %v2348, %v2364
    %v2377 = vadd.f32 %v2349, %v2369
    %v2378 = vadd.f32 %v2350, %v2369
    %v2379 = vmax.f32 %v2371, 0.0
    %v2380 = vmax.f32 %v2372, 0.0
    %v2381 = vmax.f32 %v2373, 0.0
    %v2382 = vmax.f32 %v2374, 0.0
    %v2383 = vmax.f32 %v2375, 0.0
    %v2384 = vmax.f32 %v2376, 0.0
    %v2385 = vmax.f32 %v2377, 0.0
    %v2386 = vmax.f32 %v2378, 0.0
    %v2387 = vld [vmem:[%s7] sm:$0x1]
    %v2388 = vld [vmem:[#allocation2] sm:$0x1]
    %2390 = vset.pattern.permute.xlu0 0
    %2391 = vperm.xlu0 %2390, %v2388
    %v2392 = vpop.permute.xlu0 %2391
    %v2394 = vlaneseq
    %v2395 = vshrl.u32 %v2394, 7
    %v2396 = vsub.s32 0, %v2395
    %v2397 = vrot.slane %v2392, %v2396
    %v2399 = vsel %vm202, %v2387, 0
    %2401 = vmatprep.subr.mxu0 %v2380
    %2402 = vmatpush1.msra.mxu0 %v2379
    %2403 = vmatprep.subr.mxu0 %v2382
    %2404 = vmatpush1.msra.mxu0 %v2381
    %2405 = vmatprep.subr.mxu0 %v2384
    %2406 = vmatpush1.msra.mxu0 %v2383
    %2407 = vmatprep.subr.mxu0 %v2386
    %2408 = vmatpush1.msra.mxu0 %v2385
    %2409 = vmatprep.subr.mxu0 0.0
    %2410 = vmatpush1.msra.mxu0 0.0
    %2411 = vmatprep.subr.mxu0 0.0
    %2412 = vmatpush1.msra.mxu0 0.0
    %2413 = vmatprep.subr.mxu0 0.0
    %2414 = vmatpush1.msra.mxu0 0.0
    %2415 = vmatprep.subr.mxu0 0.0
    %2416 = vmatpush1.msra.mxu0 0.0
    %2417 = vmatprep.subr.mxu0 0.0
    %2418 = vmatpush1.msra.mxu0 0.0
    %2419 = vmatprep.subr.mxu0 0.0
    %2420 = vmatpush1.msra.mxu0 0.0
    %2421 = vmatprep.subr.mxu0 0.0
    %2422 = vmatpush1.msra.mxu0 0.0
    %2423 = vmatprep.subr.mxu0 0.0
    %2424 = vmatpush1.msra.mxu0 0.0
    %2425 = vmatprep.subr.mxu0 0.0
    %2426 = vmatpush1.msra.mxu0 0.0
    %2427 = vmatprep.subr.mxu0 0.0
    %2428 = vmatpush1.msra.mxu0 0.0
    %2429 = vmatprep.subr.mxu0 0.0
    %2430 = vmatpush1.msra.mxu0 0.0
    %2431 = vmatprep.subr.mxu0 0.0
    %2432 = vmatpush1.msra.mxu0 0.0
    %2433 = vmatprep.subr.mxu0 0.0
    %2434 = vmatpush1.msra.mxu0 0.0
    %2435 = vmatprep.subr.mxu0 0.0
    %2436 = vmatpush1.msra.mxu0 0.0
    %2437 = vmatprep.subr.mxu0 0.0
    %2438 = vmatpush1.msra.mxu0 0.0
    %2439 = vmatprep.subr.mxu0 0.0
    %2440 = vmatpush1.msra.mxu0 0.0
    %2441 = vmatprep.subr.mxu0 0.0
    %2442 = vmatpush1.msra.mxu0 0.0
    %2443 = vmatprep.subr.mxu0 0.0
    %2444 = vmatpush1.msra.mxu0 0.0
    %2445 = vmatprep.subr.mxu0 0.0
    %2446 = vmatpush1.msra.mxu0 0.0
    %2447 = vmatprep.subr.mxu0 0.0
    %2448 = vmatpush1.msra.mxu0 0.0
    %2449 = vmatprep.subr.mxu0 0.0
    %2450 = vmatpush1.msra.mxu0 0.0
    %2451 = vmatprep.subr.mxu0 0.0
    %2452 = vmatpush1.msra.mxu0 0.0
    %2453 = vmatprep.subr.mxu0 0.0
    %2454 = vmatpush1.msra.mxu0 0.0
    %2455 = vmatprep.subr.mxu0 0.0
    %2456 = vmatpush1.msra.mxu0 0.0
    %2457 = vmatprep.subr.mxu0 0.0
    %2458 = vmatpush1.msra.mxu0 0.0
    %2459 = vmatprep.subr.mxu0 0.0
    %2460 = vmatpush1.msra.mxu0 0.0
    %2461 = vmatprep.subr.mxu0 0.0
    %2462 = vmatpush1.msra.mxu0 0.0
    %2463 = vmatprep.subr.mxu0 0.0
    %2464 = vmatpush1.msra.mxu0 0.0
    %2465 = vmatprep.mubr.f32.mxu0 0.0
    %2466 = vmatmul.mubr.f32.gmra.mrb[0].mxu0 %v2399
    %v2467 = vpop.f32.mrb[0].mxu0
    %v2468 = vadd.f32 %v2397, %v2467
    %v2469 = vpop.f32.mrb[0].mxu0
    %v2470 = vadd.f32 %v2397, %v2469
    %2471 = vdwg.mxu0
    %v2472 = vlog2.pop %v47
    %v2473 = vmul.f32 %v2472, 0.6931472
    %v2474 = vmul.f32 %v2473, 0.4342945
    %v2475 = vmul.f32 %v2474, -20.0
    %v2476 = vsub.f32 %v2475, 40.35725
    %v2479 = vcombine.low %v2468, %v2470
    %v2481 = vunpack.c.l.s4 1966171168
    %v2482 = vunpack.c.0.s8 %v2481
    %v2483 = vlaneseq
    %v2484 = vshrl.u32 %v2483, 7
    %v2485 = vsub.s32 %v2482, %v2484
    %v2486 = vrot.slane %v2479, %v2485
    %v2488 = vunpack.c.l.s4 1966171168
    %v2489 = vunpack.c.0.s8 %v2488
    %v2490 = vlaneseq
    %v2491 = vshrl.u32 %v2490, 7
    %v2492 = vsub.s32 %v2489, %v2491
    %v2493 = vrot.slane %v2486, %v2492
    %v2495 = vadd.f32 %v2476, %v2493
    %v2496 = vlaneseq
    %vm2497 = vcmp.ge.s32.totalorder %v2496, 0
    %vm2498 = vcmp.lt.s32.totalorder %v2496, 256
    %vm2499 = vmand %vm2497, %vm2498
    %2500 = vst.msk [vmem:[#allocation3] sm:$0x3] %vm2499, %v2495
    // Predicated region
    $region38: #{tpu_custom_call.1} parent=1 // pred_check
      _
    $region39: #{tpu_custom_call.1} parent=1 // pred_check_branch
      %2502 = sbr.rel (0) target = $region41
    $region40: #{tpu_custom_call.1} parent=1 // pred_region
      %s2504 = ssub.s32 32, 32
      %2505 = vsyncadd [#allocation4], %s2504
      %s2507 = sshll.u32 [#allocation3], 4
      %s2508 = int_to_ptr.vmem [resolvable:$true] %s2507
      %2510 = dma.vmem_to_hbm [thread:$0]  %s2508, 32, %s9, [#allocation4]
    $region41: #{tpu_custom_call.1} parent=1 // pred_fallthru
      _
    // Predicated region
    $region42: #{tpu_custom_call.1} parent=1 // pred_check
      _
    $region43: #{tpu_custom_call.1} parent=1 // pred_check_branch
      %2512 = sbr.rel (0) target = $region45
    $region44: #{tpu_custom_call.1} parent=1 // pred_region
      %2513 = dma.done [#allocation4], 32
    $region45: #{tpu_custom_call.1} parent=1 // pred_fallthru
      _
    %2514 = vsyncpa [#allocation4], 1

</llo_original>
